<compile_context>
chip_gen: v5e
topology: v5e:2x2
jax: 0.10.0
libtpu: 0.0.40
codegen_flags: <defaults>
</compile_context>

<pallas_src>
import functools

import numpy as np
import jax
import jax.numpy as jnp
from jax.experimental import pallas as pl
from jax.experimental.pallas import tpu as pltpu

KSIZE = 7
PAD = KSIZE // 2
_NACC = 4        # independent accumulator chains (VALU co-issue)
_LANE = 128
_MAX_BSUB = 8    # batch rows per inner compute step (one sublane tile)


def _round_up(x, m):
    return (x + m - 1) // m * m


def _spatial_attention_kernel(w_ref, mask_ref, x_ref, o_ref, *, W, bsub, n_sub):
    # w_ref    : SMEM (2*49,) f32   -- conv taps; avg branch pre-scaled by 1/C
    # mask_ref : VMEM (14, Lp) f32  -- [0:7] column-validity, [7:14] row-validity
    # x_ref    : VMEM (Bt, C, Lp)   -- lane-dense flattened input block
    # o_ref    : VMEM (Bt, 1, Lp)   -- lane-dense flattened attention map
    _, C, Lp = x_ref.shape

    # Hoist the 7 row masks (broadcast once: JAX does not CSE broadcasts).
    row_masks = [
        jnp.broadcast_to(mask_ref[KSIZE + ki:KSIZE + ki + 1, :], (bsub, Lp))
        for ki in range(KSIZE)
    ]

    def process(b0):
        # --- streaming channel reduction (lane-dense, f32 accumulation) ----
        xc = x_ref[pl.ds(b0, bsub), 0, :]
        s = xc.astype(jnp.float32)       # channel sum (mean's 1/C is in w)
        m = xc                            # channel max
        for c in range(1, C):
            xc = x_ref[pl.ds(b0, bsub), c, :]
            s = s + xc.astype(jnp.float32)
            m = jnp.maximum(m, xc)
        m = m.astype(jnp.float32)

        # --- 7x7 conv as lane rolls + boundary masks on the flat map -------
        accs = [jnp.zeros((bsub, Lp), jnp.float32) for _ in range(_NACC)]
        t = 0
        for kj in range(KSIZE):
            dj = kj - PAD
            if dj == 0:
                s_j, m_j = s, m
            else:
                csh = (-dj) % Lp
                cmask = jnp.broadcast_to(mask_ref[kj:kj + 1, :], (bsub, Lp))
                s_j = pltpu.roll(s, csh, 1) * cmask
                m_j = pltpu.roll(m, csh, 1) * cmask
            for ki in range(KSIZE):
                di = ki - PAD
                rsh = (-di * W) % Lp
                s_ij = s_j if rsh == 0 else pltpu.roll(s_j, rsh, 1)
                m_ij = m_j if rsh == 0 else pltpu.roll(m_j, rsh, 1)
                if di != 0:
                    rmask = row_masks[ki]
                    s_ij = s_ij * rmask
                    m_ij = m_ij * rmask
                w_a = w_ref[ki * KSIZE + kj]
                w_m = w_ref[KSIZE * KSIZE + ki * KSIZE + kj]
                accs[t % _NACC] = accs[t % _NACC] + w_a * s_ij
                accs[(t + 1) % _NACC] = accs[(t + 1) % _NACC] + w_m * m_ij
                t += 2

        acc = (accs[0] + accs[1]) + (accs[2] + accs[3])
        o_ref[pl.ds(b0, bsub), 0, :] = jax.nn.sigmoid(acc).astype(o_ref.dtype)

    if n_sub == 1:
        process(0)
    else:
        @pl.loop(0, n_sub)
        def _(sub):
            process(sub * bsub)


def _pick_blocking(B, C, Lp):
    """Choose (block_b, bsub): DMA-sized batch block, vreg-sized sub-chunk."""
    # keep per-array vreg footprint small: bsub * Lp <= ~3k f32 elements
    bsub = max(1, min(_MAX_BSUB, 3072 // Lp))
    per_b = (2 * C * Lp + 2 * Lp) * 4          # double-buffered in+out, f32 worst case
    budget = 24 << 20                           # working-set cap (safe on v7x's 64 MiB)
    target_dma = 1 << 20                        # aim for >= ~1 MiB input DMAs
    fit = max(1, budget // per_b)
    want = max(1, -(-target_dma // (C * Lp * 4)))
    bb = min(fit, want)
    bb = min(bb, max(1, -(-B // 2)))            # grid >= 2 so v7x can use both TCs
    if bb >= bsub:
        bb = (bb // bsub) * bsub
    else:
        bsub = bb
    return bb, bsub


def spatial_attention(x, conv_weight):
    """x: (B, C, H, W); conv_weight: (1, 2, 7, 7) -> (B, 1, H, W)."""
    B, C, H, W = x.shape
    HW = H * W
    Lp = _round_up(HW, _LANE)

    # Fold 1/C of the channel mean into the avg-branch taps (kernel sums).
    w = conv_weight.reshape(2, KSIZE * KSIZE).astype(jnp.float32)
    w = w.at[0].multiply(1.0 / C)
    w_flat = w.reshape(-1)                                    # (98,)

    # Boundary-validity masks over the flattened spatial axis (host-side, tiny).
    n = np.arange(Lp)
    col, row = n % W, n // W
    masks = np.zeros((2 * KSIZE, Lp), np.float32)
    for k in range(KSIZE):
        d = k - PAD
        masks[k] = ((col + d >= 0) & (col + d < W)).astype(np.float32)
        masks[KSIZE + k] = ((row + d >= 0) & (row + d < H)).astype(np.float32)
    masks = jnp.asarray(masks)

    bb, bsub = _pick_blocking(B, C, Lp)
    assert bb % bsub == 0
    B_pad = _round_up(B, bb)

    xf = x.reshape(B, C, HW)
    if Lp != HW:
        xf = jnp.pad(xf, ((0, 0), (0, 0), (0, Lp - HW)))
    if B_pad != B:
        xf = jnp.pad(xf, ((0, B_pad - B), (0, 0), (0, 0)))

    kernel = functools.partial(
        _spatial_attention_kernel, W=W, bsub=bsub, n_sub=bb // bsub)

    out = pl.pallas_call(
        kernel,
        out_shape=jax.ShapeDtypeStruct((B_pad, 1, Lp), x.dtype),
        grid_spec=pltpu.PrefetchScalarGridSpec(
            num_scalar_prefetch=0,
            grid=(B_pad // bb,),
            in_specs=[
                pl.BlockSpec(memory_space=pltpu.MemorySpace.SMEM),   # conv taps
                pl.BlockSpec((2 * KSIZE, Lp), lambda b: (0, 0)),     # masks
                pl.BlockSpec((bb, C, Lp), lambda b: (b, 0, 0)),      # input block
            ],
            out_specs=pl.BlockSpec((bb, 1, Lp), lambda b: (b, 0, 0)),
        ),
        compiler_params=pltpu.CompilerParams(
            dimension_semantics=("parallel",),
            vmem_limit_bytes=48 * 1024 * 1024,
        ),
    )(w_flat, masks, xf)

    return out[:B, :, :HW].reshape(B, 1, H, W)


def reference_spatial_attention(x, conv_weight):
    """Pure-JAX reference mirroring the PyTorch forward."""
    avg_out = jnp.mean(x, axis=1, keepdims=True)
    max_out = jnp.max(x, axis=1, keepdims=True)
    feat = jnp.concatenate([avg_out, max_out], axis=1)        # (B, 2, H, W)
    out = jax.lax.conv_general_dilated(
        feat, conv_weight,
        window_strides=(1, 1), padding=((PAD, PAD), (PAD, PAD)),
        dimension_numbers=("NCHW", "OIHW", "NCHW"))
    return jax.nn.sigmoid(out)


if __name__ == "__main__":
    key = jax.random.PRNGKey(0)
    kx, kw = jax.random.split(key)

    B, C, H, W = 2, 4, 16, 16
    x = jax.random.normal(kx, (B, C, H, W), dtype=jnp.float32)
    # Deterministic Conv2d(2, 1, 7, bias=False) weights (Kaiming-uniform-ish).
    fan_in = 2 * KSIZE * KSIZE
    bound = 1.0 / (fan_in ** 0.5)
    conv_weight = jax.random.uniform(
        kw, (1, 2, KSIZE, KSIZE), dtype=jnp.float32, minval=-bound, maxval=bound)

    out = spatial_attention(x, conv_weight)
    out = jax.block_until_ready(out)

    ref = reference_spatial_attention(x, conv_weight)
    assert out.shape == (B, 1, H, W)
    err = jnp.max(jnp.abs(out - ref))
    assert jnp.allclose(out, ref, atol=2e-5, rtol=2e-5), f"max abs err {err}"

    print("KERNEL_OK")
</pallas_src>

<mosaic_0001>
module attributes {stable_mosaic.version = 11 : i64} {
  func.func @_spatial_attention_kernel(%arg0: i32, %arg1: memref<98xf32, #tpu.memory_space<smem>>, %arg2: memref<14x256xf32, #tpu.memory_space<vmem>>, %arg3: memref<1x4x256xf32, #tpu.memory_space<vmem>>, %arg4: memref<1x1x256xf32, #tpu.memory_space<vmem>>) attributes {dimension_semantics = [#tpu.dimension_semantics<parallel>], iteration_bounds = array<i64: 2>, scalar_prefetch = 0 : i64, scratch_operands = 0 : i64, tpu.core_type = #tpu.core_type<tc>, window_params = [{transform_indices = @transform_0, window_bounds = array<i64: 98>}, {pipeline_mode = #tpu.pipeline_mode<synchronous>, transform_indices = @transform_1, window_bounds = array<i64: 14, 256>}, {transform_indices = @transform_2, window_bounds = array<i64: 1, 4, 256>}, {transform_indices = @transform_3, window_bounds = array<i64: 1, 1, 256>}]} {
    %c7 = arith.constant 7 : index
    %c0 = arith.constant 0 : index
    %0 = vector.load %arg2[%c7, %c0] : memref<14x256xf32, #tpu.memory_space<vmem>>, vector<1x256xf32>
    %c8 = arith.constant 8 : index
    %c0_0 = arith.constant 0 : index
    %1 = vector.load %arg2[%c8, %c0_0] : memref<14x256xf32, #tpu.memory_space<vmem>>, vector<1x256xf32>
    %c9 = arith.constant 9 : index
    %c0_1 = arith.constant 0 : index
    %2 = vector.load %arg2[%c9, %c0_1] : memref<14x256xf32, #tpu.memory_space<vmem>>, vector<1x256xf32>
    %c11 = arith.constant 11 : index
    %c0_2 = arith.constant 0 : index
    %3 = vector.load %arg2[%c11, %c0_2] : memref<14x256xf32, #tpu.memory_space<vmem>>, vector<1x256xf32>
    %c12 = arith.constant 12 : index
    %c0_3 = arith.constant 0 : index
    %4 = vector.load %arg2[%c12, %c0_3] : memref<14x256xf32, #tpu.memory_space<vmem>>, vector<1x256xf32>
    %c13 = arith.constant 13 : index
    %c0_4 = arith.constant 0 : index
    %5 = vector.load %arg2[%c13, %c0_4] : memref<14x256xf32, #tpu.memory_space<vmem>>, vector<1x256xf32>
    %c0_5 = arith.constant 0 : index
    %c0_6 = arith.constant 0 : index
    %c0_7 = arith.constant 0 : index
    %6 = vector.load %arg3[%c0_5, %c0_6, %c0_7] : memref<1x4x256xf32, #tpu.memory_space<vmem>>, vector<1x1x256xf32>
    %7 = vector.shape_cast %6 : vector<1x1x256xf32> to vector<1x256xf32>
    %c0_8 = arith.constant 0 : index
    %c1 = arith.constant 1 : index
    %c0_9 = arith.constant 0 : index
    %8 = vector.load %arg3[%c0_8, %c1, %c0_9] : memref<1x4x256xf32, #tpu.memory_space<vmem>>, vector<1x1x256xf32>
    %9 = vector.shape_cast %8 : vector<1x1x256xf32> to vector<1x256xf32>
    %10 = arith.addf %7, %9 : vector<1x256xf32>
    %11 = arith.maximumf %7, %9 : vector<1x256xf32>
    %c0_10 = arith.constant 0 : index
    %c2 = arith.constant 2 : index
    %c0_11 = arith.constant 0 : index
    %12 = vector.load %arg3[%c0_10, %c2, %c0_11] : memref<1x4x256xf32, #tpu.memory_space<vmem>>, vector<1x1x256xf32>
    %13 = vector.shape_cast %12 : vector<1x1x256xf32> to vector<1x256xf32>
    %14 = arith.addf %10, %13 : vector<1x256xf32>
    %15 = arith.maximumf %11, %13 : vector<1x256xf32>
    %c0_12 = arith.constant 0 : index
    %c3 = arith.constant 3 : index
    %c0_13 = arith.constant 0 : index
    %16 = vector.load %arg3[%c0_12, %c3, %c0_13] : memref<1x4x256xf32, #tpu.memory_space<vmem>>, vector<1x1x256xf32>
    %17 = vector.shape_cast %16 : vector<1x1x256xf32> to vector<1x256xf32>
    %18 = arith.addf %14, %17 : vector<1x256xf32>
    %19 = arith.maximumf %15, %17 : vector<1x256xf32>
    %cst = arith.constant 0.000000e+00 : f32
    %20 = vector.broadcast %cst : f32 to vector<1x256xf32>
    %cst_14 = arith.constant 0.000000e+00 : f32
    %21 = vector.broadcast %cst_14 : f32 to vector<1x256xf32>
    %cst_15 = arith.constant 0.000000e+00 : f32
    %22 = vector.broadcast %cst_15 : f32 to vector<1x256xf32>
    %cst_16 = arith.constant 0.000000e+00 : f32
    %23 = vector.broadcast %cst_16 : f32 to vector<1x256xf32>
    %c0_17 = arith.constant 0 : index
    %c0_18 = arith.constant 0 : index
    %24 = vector.load %arg2[%c0_17, %c0_18] : memref<14x256xf32, #tpu.memory_space<vmem>>, vector<1x256xf32>
    %c3_i32 = arith.constant 3 : i32
    %25 = tpu.dynamic_rotate %18 by %c3_i32 dim 1 : vector<1x256xf32>, i32 -> vector<1x256xf32>
    %26 = arith.mulf %25, %24 : vector<1x256xf32>
    %c3_i32_19 = arith.constant 3 : i32
    %27 = tpu.dynamic_rotate %19 by %c3_i32_19 dim 1 : vector<1x256xf32>, i32 -> vector<1x256xf32>
    %28 = arith.mulf %27, %24 : vector<1x256xf32>
    %c48_i32 = arith.constant 48 : i32
    %29 = tpu.dynamic_rotate %26 by %c48_i32 dim 1 : vector<1x256xf32>, i32 -> vector<1x256xf32>
    %c48_i32_20 = arith.constant 48 : i32
    %30 = tpu.dynamic_rotate %28 by %c48_i32_20 dim 1 : vector<1x256xf32>, i32 -> vector<1x256xf32>
    %31 = arith.mulf %29, %0 : vector<1x256xf32>
    %32 = arith.mulf %30, %0 : vector<1x256xf32>
    %c0_21 = arith.constant 0 : index
    %33 = memref.load %arg1[%c0_21] : memref<98xf32, #tpu.memory_space<smem>>
    %c49 = arith.constant 49 : index
    %34 = memref.load %arg1[%c49] : memref<98xf32, #tpu.memory_space<smem>>
    %35 = vector.broadcast %33 : f32 to vector<1x256xf32>
    %36 = arith.mulf %35, %31 : vector<1x256xf32>
    %37 = arith.addf %20, %36 : vector<1x256xf32>
    %38 = vector.broadcast %34 : f32 to vector<1x256xf32>
    %39 = arith.mulf %38, %32 : vector<1x256xf32>
    %40 = arith.addf %21, %39 : vector<1x256xf32>
    %c32_i32 = arith.constant 32 : i32
    %41 = tpu.dynamic_rotate %26 by %c32_i32 dim 1 : vector<1x256xf32>, i32 -> vector<1x256xf32>
    %c32_i32_22 = arith.constant 32 : i32
    %42 = tpu.dynamic_rotate %28 by %c32_i32_22 dim 1 : vector<1x256xf32>, i32 -> vector<1x256xf32>
    %43 = arith.mulf %41, %1 : vector<1x256xf32>
    %44 = arith.mulf %42, %1 : vector<1x256xf32>
    %c7_23 = arith.constant 7 : index
    %45 = memref.load %arg1[%c7_23] : memref<98xf32, #tpu.memory_space<smem>>
    %c56 = arith.constant 56 : index
    %46 = memref.load %arg1[%c56] : memref<98xf32, #tpu.memory_space<smem>>
    %47 = vector.broadcast %45 : f32 to vector<1x256xf32>
    %48 = arith.mulf %47, %43 : vector<1x256xf32>
    %49 = arith.addf %22, %48 : vector<1x256xf32>
    %50 = vector.broadcast %46 : f32 to vector<1x256xf32>
    %51 = arith.mulf %50, %44 : vector<1x256xf32>
    %52 = arith.addf %23, %51 : vector<1x256xf32>
    %c16_i32 = arith.constant 16 : i32
    %53 = tpu.dynamic_rotate %26 by %c16_i32 dim 1 : vector<1x256xf32>, i32 -> vector<1x256xf32>
    %c16_i32_24 = arith.constant 16 : i32
    %54 = tpu.dynamic_rotate %28 by %c16_i32_24 dim 1 : vector<1x256xf32>, i32 -> vector<1x256xf32>
    %55 = arith.mulf %53, %2 : vector<1x256xf32>
    %56 = arith.mulf %54, %2 : vector<1x256xf32>
    %c14 = arith.constant 14 : index
    %57 = memref.load %arg1[%c14] : memref<98xf32, #tpu.memory_space<smem>>
    %c63 = arith.constant 63 : index
    %58 = memref.load %arg1[%c63] : memref<98xf32, #tpu.memory_space<smem>>
    %59 = vector.broadcast %57 : f32 to vector<1x256xf32>
    %60 = arith.mulf %59, %55 : vector<1x256xf32>
    %61 = arith.addf %37, %60 : vector<1x256xf32>
    %62 = vector.broadcast %58 : f32 to vector<1x256xf32>
    %63 = arith.mulf %62, %56 : vector<1x256xf32>
    %64 = arith.addf %40, %63 : vector<1x256xf32>
    %c21 = arith.constant 21 : index
    %65 = memref.load %arg1[%c21] : memref<98xf32, #tpu.memory_space<smem>>
    %c70 = arith.constant 70 : index
    %66 = memref.load %arg1[%c70] : memref<98xf32, #tpu.memory_space<smem>>
    %67 = vector.broadcast %65 : f32 to vector<1x256xf32>
    %68 = arith.mulf %67, %26 : vector<1x256xf32>
    %69 = arith.addf %49, %68 : vector<1x256xf32>
    %70 = vector.broadcast %66 : f32 to vector<1x256xf32>
    %71 = arith.mulf %70, %28 : vector<1x256xf32>
    %72 = arith.addf %52, %71 : vector<1x256xf32>
    %c240_i32 = arith.constant 240 : i32
    %73 = tpu.dynamic_rotate %26 by %c240_i32 dim 1 : vector<1x256xf32>, i32 -> vector<1x256xf32>
    %c240_i32_25 = arith.constant 240 : i32
    %74 = tpu.dynamic_rotate %28 by %c240_i32_25 dim 1 : vector<1x256xf32>, i32 -> vector<1x256xf32>
    %75 = arith.mulf %73, %3 : vector<1x256xf32>
    %76 = arith.mulf %74, %3 : vector<1x256xf32>
    %c28 = arith.constant 28 : index
    %77 = memref.load %arg1[%c28] : memref<98xf32, #tpu.memory_space<smem>>
    %c77 = arith.constant 77 : index
    %78 = memref.load %arg1[%c77] : memref<98xf32, #tpu.memory_space<smem>>
    %79 = vector.broadcast %77 : f32 to vector<1x256xf32>
    %80 = arith.mulf %79, %75 : vector<1x256xf32>
    %81 = arith.addf %61, %80 : vector<1x256xf32>
    %82 = vector.broadcast %78 : f32 to vector<1x256xf32>
    %83 = arith.mulf %82, %76 : vector<1x256xf32>
    %84 = arith.addf %64, %83 : vector<1x256xf32>
    %c224_i32 = arith.constant 224 : i32
    %85 = tpu.dynamic_rotate %26 by %c224_i32 dim 1 : vector<1x256xf32>, i32 -> vector<1x256xf32>
    %c224_i32_26 = arith.constant 224 : i32
    %86 = tpu.dynamic_rotate %28 by %c224_i32_26 dim 1 : vector<1x256xf32>, i32 -> vector<1x256xf32>
    %87 = arith.mulf %85, %4 : vector<1x256xf32>
    %88 = arith.mulf %86, %4 : vector<1x256xf32>
    %c35 = arith.constant 35 : index
    %89 = memref.load %arg1[%c35] : memref<98xf32, #tpu.memory_space<smem>>
    %c84 = arith.constant 84 : index
    %90 = memref.load %arg1[%c84] : memref<98xf32, #tpu.memory_space<smem>>
    %91 = vector.broadcast %89 : f32 to vector<1x256xf32>
    %92 = arith.mulf %91, %87 : vector<1x256xf32>
    %93 = arith.addf %69, %92 : vector<1x256xf32>
    %94 = vector.broadcast %90 : f32 to vector<1x256xf32>
    %95 = arith.mulf %94, %88 : vector<1x256xf32>
    %96 = arith.addf %72, %95 : vector<1x256xf32>
    %c208_i32 = arith.constant 208 : i32
    %97 = tpu.dynamic_rotate %26 by %c208_i32 dim 1 : vector<1x256xf32>, i32 -> vector<1x256xf32>
    %c208_i32_27 = arith.constant 208 : i32
    %98 = tpu.dynamic_rotate %28 by %c208_i32_27 dim 1 : vector<1x256xf32>, i32 -> vector<1x256xf32>
    %99 = arith.mulf %97, %5 : vector<1x256xf32>
    %100 = arith.mulf %98, %5 : vector<1x256xf32>
    %c42 = arith.constant 42 : index
    %101 = memref.load %arg1[%c42] : memref<98xf32, #tpu.memory_space<smem>>
    %c91 = arith.constant 91 : index
    %102 = memref.load %arg1[%c91] : memref<98xf32, #tpu.memory_space<smem>>
    %103 = vector.broadcast %101 : f32 to vector<1x256xf32>
    %104 = arith.mulf %103, %99 : vector<1x256xf32>
    %105 = arith.addf %81, %104 : vector<1x256xf32>
    %106 = vector.broadcast %102 : f32 to vector<1x256xf32>
    %107 = arith.mulf %106, %100 : vector<1x256xf32>
    %108 = arith.addf %84, %107 : vector<1x256xf32>
    %c1_28 = arith.constant 1 : index
    %c0_29 = arith.constant 0 : index
    %109 = vector.load %arg2[%c1_28, %c0_29] : memref<14x256xf32, #tpu.memory_space<vmem>>, vector<1x256xf32>
    %c2_i32 = arith.constant 2 : i32
    %110 = tpu.dynamic_rotate %18 by %c2_i32 dim 1 : vector<1x256xf32>, i32 -> vector<1x256xf32>
    %111 = arith.mulf %110, %109 : vector<1x256xf32>
    %c2_i32_30 = arith.constant 2 : i32
    %112 = tpu.dynamic_rotate %19 by %c2_i32_30 dim 1 : vector<1x256xf32>, i32 -> vector<1x256xf32>
    %113 = arith.mulf %112, %109 : vector<1x256xf32>
    %c48_i32_31 = arith.constant 48 : i32
    %114 = tpu.dynamic_rotate %111 by %c48_i32_31 dim 1 : vector<1x256xf32>, i32 -> vector<1x256xf32>
    %c48_i32_32 = arith.constant 48 : i32
    %115 = tpu.dynamic_rotate %113 by %c48_i32_32 dim 1 : vector<1x256xf32>, i32 -> vector<1x256xf32>
    %116 = arith.mulf %114, %0 : vector<1x256xf32>
    %117 = arith.mulf %115, %0 : vector<1x256xf32>
    %c1_33 = arith.constant 1 : index
    %118 = memref.load %arg1[%c1_33] : memref<98xf32, #tpu.memory_space<smem>>
    %c50 = arith.constant 50 : index
    %119 = memref.load %arg1[%c50] : memref<98xf32, #tpu.memory_space<smem>>
    %120 = vector.broadcast %118 : f32 to vector<1x256xf32>
    %121 = arith.mulf %120, %116 : vector<1x256xf32>
    %122 = arith.addf %93, %121 : vector<1x256xf32>
    %123 = vector.broadcast %119 : f32 to vector<1x256xf32>
    %124 = arith.mulf %123, %117 : vector<1x256xf32>
    %125 = arith.addf %96, %124 : vector<1x256xf32>
    %c32_i32_34 = arith.constant 32 : i32
    %126 = tpu.dynamic_rotate %111 by %c32_i32_34 dim 1 : vector<1x256xf32>, i32 -> vector<1x256xf32>
    %c32_i32_35 = arith.constant 32 : i32
    %127 = tpu.dynamic_rotate %113 by %c32_i32_35 dim 1 : vector<1x256xf32>, i32 -> vector<1x256xf32>
    %128 = arith.mulf %126, %1 : vector<1x256xf32>
    %129 = arith.mulf %127, %1 : vector<1x256xf32>
    %c8_36 = arith.constant 8 : index
    %130 = memref.load %arg1[%c8_36] : memref<98xf32, #tpu.memory_space<smem>>
    %c57 = arith.constant 57 : index
    %131 = memref.load %arg1[%c57] : memref<98xf32, #tpu.memory_space<smem>>
    %132 = vector.broadcast %130 : f32 to vector<1x256xf32>
    %133 = arith.mulf %132, %128 : vector<1x256xf32>
    %134 = arith.addf %105, %133 : vector<1x256xf32>
    %135 = vector.broadcast %131 : f32 to vector<1x256xf32>
    %136 = arith.mulf %135, %129 : vector<1x256xf32>
    %137 = arith.addf %108, %136 : vector<1x256xf32>
    %c16_i32_37 = arith.constant 16 : i32
    %138 = tpu.dynamic_rotate %111 by %c16_i32_37 dim 1 : vector<1x256xf32>, i32 -> vector<1x256xf32>
    %c16_i32_38 = arith.constant 16 : i32
    %139 = tpu.dynamic_rotate %113 by %c16_i32_38 dim 1 : vector<1x256xf32>, i32 -> vector<1x256xf32>
    %140 = arith.mulf %138, %2 : vector<1x256xf32>
    %141 = arith.mulf %139, %2 : vector<1x256xf32>
    %c15 = arith.constant 15 : index
    %142 = memref.load %arg1[%c15] : memref<98xf32, #tpu.memory_space<smem>>
    %c64 = arith.constant 64 : index
    %143 = memref.load %arg1[%c64] : memref<98xf32, #tpu.memory_space<smem>>
    %144 = vector.broadcast %142 : f32 to vector<1x256xf32>
    %145 = arith.mulf %144, %140 : vector<1x256xf32>
    %146 = arith.addf %122, %145 : vector<1x256xf32>
    %147 = vector.broadcast %143 : f32 to vector<1x256xf32>
    %148 = arith.mulf %147, %141 : vector<1x256xf32>
    %149 = arith.addf %125, %148 : vector<1x256xf32>
    %c22 = arith.constant 22 : index
    %150 = memref.load %arg1[%c22] : memref<98xf32, #tpu.memory_space<smem>>
    %c71 = arith.constant 71 : index
    %151 = memref.load %arg1[%c71] : memref<98xf32, #tpu.memory_space<smem>>
    %152 = vector.broadcast %150 : f32 to vector<1x256xf32>
    %153 = arith.mulf %152, %111 : vector<1x256xf32>
    %154 = arith.addf %134, %153 : vector<1x256xf32>
    %155 = vector.broadcast %151 : f32 to vector<1x256xf32>
    %156 = arith.mulf %155, %113 : vector<1x256xf32>
    %157 = arith.addf %137, %156 : vector<1x256xf32>
    %c240_i32_39 = arith.constant 240 : i32
    %158 = tpu.dynamic_rotate %111 by %c240_i32_39 dim 1 : vector<1x256xf32>, i32 -> vector<1x256xf32>
    %c240_i32_40 = arith.constant 240 : i32
    %159 = tpu.dynamic_rotate %113 by %c240_i32_40 dim 1 : vector<1x256xf32>, i32 -> vector<1x256xf32>
    %160 = arith.mulf %158, %3 : vector<1x256xf32>
    %161 = arith.mulf %159, %3 : vector<1x256xf32>
    %c29 = arith.constant 29 : index
    %162 = memref.load %arg1[%c29] : memref<98xf32, #tpu.memory_space<smem>>
    %c78 = arith.constant 78 : index
    %163 = memref.load %arg1[%c78] : memref<98xf32, #tpu.memory_space<smem>>
    %164 = vector.broadcast %162 : f32 to vector<1x256xf32>
    %165 = arith.mulf %164, %160 : vector<1x256xf32>
    %166 = arith.addf %146, %165 : vector<1x256xf32>
    %167 = vector.broadcast %163 : f32 to vector<1x256xf32>
    %168 = arith.mulf %167, %161 : vector<1x256xf32>
    %169 = arith.addf %149, %168 : vector<1x256xf32>
    %c224_i32_41 = arith.constant 224 : i32
    %170 = tpu.dynamic_rotate %111 by %c224_i32_41 dim 1 : vector<1x256xf32>, i32 -> vector<1x256xf32>
    %c224_i32_42 = arith.constant 224 : i32
    %171 = tpu.dynamic_rotate %113 by %c224_i32_42 dim 1 : vector<1x256xf32>, i32 -> vector<1x256xf32>
    %172 = arith.mulf %170, %4 : vector<1x256xf32>
    %173 = arith.mulf %171, %4 : vector<1x256xf32>
    %c36 = arith.constant 36 : index
    %174 = memref.load %arg1[%c36] : memref<98xf32, #tpu.memory_space<smem>>
    %c85 = arith.constant 85 : index
    %175 = memref.load %arg1[%c85] : memref<98xf32, #tpu.memory_space<smem>>
    %176 = vector.broadcast %174 : f32 to vector<1x256xf32>
    %177 = arith.mulf %176, %172 : vector<1x256xf32>
    %178 = arith.addf %154, %177 : vector<1x256xf32>
    %179 = vector.broadcast %175 : f32 to vector<1x256xf32>
    %180 = arith.mulf %179, %173 : vector<1x256xf32>
    %181 = arith.addf %157, %180 : vector<1x256xf32>
    %c208_i32_43 = arith.constant 208 : i32
    %182 = tpu.dynamic_rotate %111 by %c208_i32_43 dim 1 : vector<1x256xf32>, i32 -> vector<1x256xf32>
    %c208_i32_44 = arith.constant 208 : i32
    %183 = tpu.dynamic_rotate %113 by %c208_i32_44 dim 1 : vector<1x256xf32>, i32 -> vector<1x256xf32>
    %184 = arith.mulf %182, %5 : vector<1x256xf32>
    %185 = arith.mulf %183, %5 : vector<1x256xf32>
    %c43 = arith.constant 43 : index
    %186 = memref.load %arg1[%c43] : memref<98xf32, #tpu.memory_space<smem>>
    %c92 = arith.constant 92 : index
    %187 = memref.load %arg1[%c92] : memref<98xf32, #tpu.memory_space<smem>>
    %188 = vector.broadcast %186 : f32 to vector<1x256xf32>
    %189 = arith.mulf %188, %184 : vector<1x256xf32>
    %190 = arith.addf %166, %189 : vector<1x256xf32>
    %191 = vector.broadcast %187 : f32 to vector<1x256xf32>
    %192 = arith.mulf %191, %185 : vector<1x256xf32>
    %193 = arith.addf %169, %192 : vector<1x256xf32>
    %c2_45 = arith.constant 2 : index
    %c0_46 = arith.constant 0 : index
    %194 = vector.load %arg2[%c2_45, %c0_46] : memref<14x256xf32, #tpu.memory_space<vmem>>, vector<1x256xf32>
    %c1_i32 = arith.constant 1 : i32
    %195 = tpu.dynamic_rotate %18 by %c1_i32 dim 1 : vector<1x256xf32>, i32 -> vector<1x256xf32>
    %196 = arith.mulf %195, %194 : vector<1x256xf32>
    %c1_i32_47 = arith.constant 1 : i32
    %197 = tpu.dynamic_rotate %19 by %c1_i32_47 dim 1 : vector<1x256xf32>, i32 -> vector<1x256xf32>
    %198 = arith.mulf %197, %194 : vector<1x256xf32>
    %c48_i32_48 = arith.constant 48 : i32
    %199 = tpu.dynamic_rotate %196 by %c48_i32_48 dim 1 : vector<1x256xf32>, i32 -> vector<1x256xf32>
    %c48_i32_49 = arith.constant 48 : i32
    %200 = tpu.dynamic_rotate %198 by %c48_i32_49 dim 1 : vector<1x256xf32>, i32 -> vector<1x256xf32>
    %201 = arith.mulf %199, %0 : vector<1x256xf32>
    %202 = arith.mulf %200, %0 : vector<1x256xf32>
    %c2_50 = arith.constant 2 : index
    %203 = memref.load %arg1[%c2_50] : memref<98xf32, #tpu.memory_space<smem>>
    %c51 = arith.constant 51 : index
    %204 = memref.load %arg1[%c51] : memref<98xf32, #tpu.memory_space<smem>>
    %205 = vector.broadcast %203 : f32 to vector<1x256xf32>
    %206 = arith.mulf %205, %201 : vector<1x256xf32>
    %207 = arith.addf %178, %206 : vector<1x256xf32>
    %208 = vector.broadcast %204 : f32 to vector<1x256xf32>
    %209 = arith.mulf %208, %202 : vector<1x256xf32>
    %210 = arith.addf %181, %209 : vector<1x256xf32>
    %c32_i32_51 = arith.constant 32 : i32
    %211 = tpu.dynamic_rotate %196 by %c32_i32_51 dim 1 : vector<1x256xf32>, i32 -> vector<1x256xf32>
    %c32_i32_52 = arith.constant 32 : i32
    %212 = tpu.dynamic_rotate %198 by %c32_i32_52 dim 1 : vector<1x256xf32>, i32 -> vector<1x256xf32>
    %213 = arith.mulf %211, %1 : vector<1x256xf32>
    %214 = arith.mulf %212, %1 : vector<1x256xf32>
    %c9_53 = arith.constant 9 : index
    %215 = memref.load %arg1[%c9_53] : memref<98xf32, #tpu.memory_space<smem>>
    %c58 = arith.constant 58 : index
    %216 = memref.load %arg1[%c58] : memref<98xf32, #tpu.memory_space<smem>>
    %217 = vector.broadcast %215 : f32 to vector<1x256xf32>
    %218 = arith.mulf %217, %213 : vector<1x256xf32>
    %219 = arith.addf %190, %218 : vector<1x256xf32>
    %220 = vector.broadcast %216 : f32 to vector<1x256xf32>
    %221 = arith.mulf %220, %214 : vector<1x256xf32>
    %222 = arith.addf %193, %221 : vector<1x256xf32>
    %c16_i32_54 = arith.constant 16 : i32
    %223 = tpu.dynamic_rotate %196 by %c16_i32_54 dim 1 : vector<1x256xf32>, i32 -> vector<1x256xf32>
    %c16_i32_55 = arith.constant 16 : i32
    %224 = tpu.dynamic_rotate %198 by %c16_i32_55 dim 1 : vector<1x256xf32>, i32 -> vector<1x256xf32>
    %225 = arith.mulf %223, %2 : vector<1x256xf32>
    %226 = arith.mulf %224, %2 : vector<1x256xf32>
    %c16 = arith.constant 16 : index
    %227 = memref.load %arg1[%c16] : memref<98xf32, #tpu.memory_space<smem>>
    %c65 = arith.constant 65 : index
    %228 = memref.load %arg1[%c65] : memref<98xf32, #tpu.memory_space<smem>>
    %229 = vector.broadcast %227 : f32 to vector<1x256xf32>
    %230 = arith.mulf %229, %225 : vector<1x256xf32>
    %231 = arith.addf %207, %230 : vector<1x256xf32>
    %232 = vector.broadcast %228 : f32 to vector<1x256xf32>
    %233 = arith.mulf %232, %226 : vector<1x256xf32>
    %234 = arith.addf %210, %233 : vector<1x256xf32>
    %c23 = arith.constant 23 : index
    %235 = memref.load %arg1[%c23] : memref<98xf32, #tpu.memory_space<smem>>
    %c72 = arith.constant 72 : index
    %236 = memref.load %arg1[%c72] : memref<98xf32, #tpu.memory_space<smem>>
    %237 = vector.broadcast %235 : f32 to vector<1x256xf32>
    %238 = arith.mulf %237, %196 : vector<1x256xf32>
    %239 = arith.addf %219, %238 : vector<1x256xf32>
    %240 = vector.broadcast %236 : f32 to vector<1x256xf32>
    %241 = arith.mulf %240, %198 : vector<1x256xf32>
    %242 = arith.addf %222, %241 : vector<1x256xf32>
    %c240_i32_56 = arith.constant 240 : i32
    %243 = tpu.dynamic_rotate %196 by %c240_i32_56 dim 1 : vector<1x256xf32>, i32 -> vector<1x256xf32>
    %c240_i32_57 = arith.constant 240 : i32
    %244 = tpu.dynamic_rotate %198 by %c240_i32_57 dim 1 : vector<1x256xf32>, i32 -> vector<1x256xf32>
    %245 = arith.mulf %243, %3 : vector<1x256xf32>
    %246 = arith.mulf %244, %3 : vector<1x256xf32>
    %c30 = arith.constant 30 : index
    %247 = memref.load %arg1[%c30] : memref<98xf32, #tpu.memory_space<smem>>
    %c79 = arith.constant 79 : index
    %248 = memref.load %arg1[%c79] : memref<98xf32, #tpu.memory_space<smem>>
    %249 = vector.broadcast %247 : f32 to vector<1x256xf32>
    %250 = arith.mulf %249, %245 : vector<1x256xf32>
    %251 = arith.addf %231, %250 : vector<1x256xf32>
    %252 = vector.broadcast %248 : f32 to vector<1x256xf32>
    %253 = arith.mulf %252, %246 : vector<1x256xf32>
    %254 = arith.addf %234, %253 : vector<1x256xf32>
    %c224_i32_58 = arith.constant 224 : i32
    %255 = tpu.dynamic_rotate %196 by %c224_i32_58 dim 1 : vector<1x256xf32>, i32 -> vector<1x256xf32>
    %c224_i32_59 = arith.constant 224 : i32
    %256 = tpu.dynamic_rotate %198 by %c224_i32_59 dim 1 : vector<1x256xf32>, i32 -> vector<1x256xf32>
    %257 = arith.mulf %255, %4 : vector<1x256xf32>
    %258 = arith.mulf %256, %4 : vector<1x256xf32>
    %c37 = arith.constant 37 : index
    %259 = memref.load %arg1[%c37] : memref<98xf32, #tpu.memory_space<smem>>
    %c86 = arith.constant 86 : index
    %260 = memref.load %arg1[%c86] : memref<98xf32, #tpu.memory_space<smem>>
    %261 = vector.broadcast %259 : f32 to vector<1x256xf32>
    %262 = arith.mulf %261, %257 : vector<1x256xf32>
    %263 = arith.addf %239, %262 : vector<1x256xf32>
    %264 = vector.broadcast %260 : f32 to vector<1x256xf32>
    %265 = arith.mulf %264, %258 : vector<1x256xf32>
    %266 = arith.addf %242, %265 : vector<1x256xf32>
    %c208_i32_60 = arith.constant 208 : i32
    %267 = tpu.dynamic_rotate %196 by %c208_i32_60 dim 1 : vector<1x256xf32>, i32 -> vector<1x256xf32>
    %c208_i32_61 = arith.constant 208 : i32
    %268 = tpu.dynamic_rotate %198 by %c208_i32_61 dim 1 : vector<1x256xf32>, i32 -> vector<1x256xf32>
    %269 = arith.mulf %267, %5 : vector<1x256xf32>
    %270 = arith.mulf %268, %5 : vector<1x256xf32>
    %c44 = arith.constant 44 : index
    %271 = memref.load %arg1[%c44] : memref<98xf32, #tpu.memory_space<smem>>
    %c93 = arith.constant 93 : index
    %272 = memref.load %arg1[%c93] : memref<98xf32, #tpu.memory_space<smem>>
    %273 = vector.broadcast %271 : f32 to vector<1x256xf32>
    %274 = arith.mulf %273, %269 : vector<1x256xf32>
    %275 = arith.addf %251, %274 : vector<1x256xf32>
    %276 = vector.broadcast %272 : f32 to vector<1x256xf32>
    %277 = arith.mulf %276, %270 : vector<1x256xf32>
    %278 = arith.addf %254, %277 : vector<1x256xf32>
    %c48_i32_62 = arith.constant 48 : i32
    %279 = tpu.dynamic_rotate %18 by %c48_i32_62 dim 1 : vector<1x256xf32>, i32 -> vector<1x256xf32>
    %c48_i32_63 = arith.constant 48 : i32
    %280 = tpu.dynamic_rotate %19 by %c48_i32_63 dim 1 : vector<1x256xf32>, i32 -> vector<1x256xf32>
    %281 = arith.mulf %279, %0 : vector<1x256xf32>
    %282 = arith.mulf %280, %0 : vector<1x256xf32>
    %c3_64 = arith.constant 3 : index
    %283 = memref.load %arg1[%c3_64] : memref<98xf32, #tpu.memory_space<smem>>
    %c52 = arith.constant 52 : index
    %284 = memref.load %arg1[%c52] : memref<98xf32, #tpu.memory_space<smem>>
    %285 = vector.broadcast %283 : f32 to vector<1x256xf32>
    %286 = arith.mulf %285, %281 : vector<1x256xf32>
    %287 = arith.addf %263, %286 : vector<1x256xf32>
    %288 = vector.broadcast %284 : f32 to vector<1x256xf32>
    %289 = arith.mulf %288, %282 : vector<1x256xf32>
    %290 = arith.addf %266, %289 : vector<1x256xf32>
    %c32_i32_65 = arith.constant 32 : i32
    %291 = tpu.dynamic_rotate %18 by %c32_i32_65 dim 1 : vector<1x256xf32>, i32 -> vector<1x256xf32>
    %c32_i32_66 = arith.constant 32 : i32
    %292 = tpu.dynamic_rotate %19 by %c32_i32_66 dim 1 : vector<1x256xf32>, i32 -> vector<1x256xf32>
    %293 = arith.mulf %291, %1 : vector<1x256xf32>
    %294 = arith.mulf %292, %1 : vector<1x256xf32>
    %c10 = arith.constant 10 : index
    %295 = memref.load %arg1[%c10] : memref<98xf32, #tpu.memory_space<smem>>
    %c59 = arith.constant 59 : index
    %296 = memref.load %arg1[%c59] : memref<98xf32, #tpu.memory_space<smem>>
    %297 = vector.broadcast %295 : f32 to vector<1x256xf32>
    %298 = arith.mulf %297, %293 : vector<1x256xf32>
    %299 = arith.addf %275, %298 : vector<1x256xf32>
    %300 = vector.broadcast %296 : f32 to vector<1x256xf32>
    %301 = arith.mulf %300, %294 : vector<1x256xf32>
    %302 = arith.addf %278, %301 : vector<1x256xf32>
    %c16_i32_67 = arith.constant 16 : i32
    %303 = tpu.dynamic_rotate %18 by %c16_i32_67 dim 1 : vector<1x256xf32>, i32 -> vector<1x256xf32>
    %c16_i32_68 = arith.constant 16 : i32
    %304 = tpu.dynamic_rotate %19 by %c16_i32_68 dim 1 : vector<1x256xf32>, i32 -> vector<1x256xf32>
    %305 = arith.mulf %303, %2 : vector<1x256xf32>
    %306 = arith.mulf %304, %2 : vector<1x256xf32>
    %c17 = arith.constant 17 : index
    %307 = memref.load %arg1[%c17] : memref<98xf32, #tpu.memory_space<smem>>
    %c66 = arith.constant 66 : index
    %308 = memref.load %arg1[%c66] : memref<98xf32, #tpu.memory_space<smem>>
    %309 = vector.broadcast %307 : f32 to vector<1x256xf32>
    %310 = arith.mulf %309, %305 : vector<1x256xf32>
    %311 = arith.addf %287, %310 : vector<1x256xf32>
    %312 = vector.broadcast %308 : f32 to vector<1x256xf32>
    %313 = arith.mulf %312, %306 : vector<1x256xf32>
    %314 = arith.addf %290, %313 : vector<1x256xf32>
    %c24 = arith.constant 24 : index
    %315 = memref.load %arg1[%c24] : memref<98xf32, #tpu.memory_space<smem>>
    %c73 = arith.constant 73 : index
    %316 = memref.load %arg1[%c73] : memref<98xf32, #tpu.memory_space<smem>>
    %317 = vector.broadcast %315 : f32 to vector<1x256xf32>
    %318 = arith.mulf %317, %18 : vector<1x256xf32>
    %319 = arith.addf %299, %318 : vector<1x256xf32>
    %320 = vector.broadcast %316 : f32 to vector<1x256xf32>
    %321 = arith.mulf %320, %19 : vector<1x256xf32>
    %322 = arith.addf %302, %321 : vector<1x256xf32>
    %c240_i32_69 = arith.constant 240 : i32
    %323 = tpu.dynamic_rotate %18 by %c240_i32_69 dim 1 : vector<1x256xf32>, i32 -> vector<1x256xf32>
    %c240_i32_70 = arith.constant 240 : i32
    %324 = tpu.dynamic_rotate %19 by %c240_i32_70 dim 1 : vector<1x256xf32>, i32 -> vector<1x256xf32>
    %325 = arith.mulf %323, %3 : vector<1x256xf32>
    %326 = arith.mulf %324, %3 : vector<1x256xf32>
    %c31 = arith.constant 31 : index
    %327 = memref.load %arg1[%c31] : memref<98xf32, #tpu.memory_space<smem>>
    %c80 = arith.constant 80 : index
    %328 = memref.load %arg1[%c80] : memref<98xf32, #tpu.memory_space<smem>>
    %329 = vector.broadcast %327 : f32 to vector<1x256xf32>
    %330 = arith.mulf %329, %325 : vector<1x256xf32>
    %331 = arith.addf %311, %330 : vector<1x256xf32>
    %332 = vector.broadcast %328 : f32 to vector<1x256xf32>
    %333 = arith.mulf %332, %326 : vector<1x256xf32>
    %334 = arith.addf %314, %333 : vector<1x256xf32>
    %c224_i32_71 = arith.constant 224 : i32
    %335 = tpu.dynamic_rotate %18 by %c224_i32_71 dim 1 : vector<1x256xf32>, i32 -> vector<1x256xf32>
    %c224_i32_72 = arith.constant 224 : i32
    %336 = tpu.dynamic_rotate %19 by %c224_i32_72 dim 1 : vector<1x256xf32>, i32 -> vector<1x256xf32>
    %337 = arith.mulf %335, %4 : vector<1x256xf32>
    %338 = arith.mulf %336, %4 : vector<1x256xf32>
    %c38 = arith.constant 38 : index
    %339 = memref.load %arg1[%c38] : memref<98xf32, #tpu.memory_space<smem>>
    %c87 = arith.constant 87 : index
    %340 = memref.load %arg1[%c87] : memref<98xf32, #tpu.memory_space<smem>>
    %341 = vector.broadcast %339 : f32 to vector<1x256xf32>
    %342 = arith.mulf %341, %337 : vector<1x256xf32>
    %343 = arith.addf %319, %342 : vector<1x256xf32>
    %344 = vector.broadcast %340 : f32 to vector<1x256xf32>
    %345 = arith.mulf %344, %338 : vector<1x256xf32>
    %346 = arith.addf %322, %345 : vector<1x256xf32>
    %c208_i32_73 = arith.constant 208 : i32
    %347 = tpu.dynamic_rotate %18 by %c208_i32_73 dim 1 : vector<1x256xf32>, i32 -> vector<1x256xf32>
    %c208_i32_74 = arith.constant 208 : i32
    %348 = tpu.dynamic_rotate %19 by %c208_i32_74 dim 1 : vector<1x256xf32>, i32 -> vector<1x256xf32>
    %349 = arith.mulf %347, %5 : vector<1x256xf32>
    %350 = arith.mulf %348, %5 : vector<1x256xf32>
    %c45 = arith.constant 45 : index
    %351 = memref.load %arg1[%c45] : memref<98xf32, #tpu.memory_space<smem>>
    %c94 = arith.constant 94 : index
    %352 = memref.load %arg1[%c94] : memref<98xf32, #tpu.memory_space<smem>>
    %353 = vector.broadcast %351 : f32 to vector<1x256xf32>
    %354 = arith.mulf %353, %349 : vector<1x256xf32>
    %355 = arith.addf %331, %354 : vector<1x256xf32>
    %356 = vector.broadcast %352 : f32 to vector<1x256xf32>
    %357 = arith.mulf %356, %350 : vector<1x256xf32>
    %358 = arith.addf %334, %357 : vector<1x256xf32>
    %c4 = arith.constant 4 : index
    %c0_75 = arith.constant 0 : index
    %359 = vector.load %arg2[%c4, %c0_75] : memref<14x256xf32, #tpu.memory_space<vmem>>, vector<1x256xf32>
    %c255_i32 = arith.constant 255 : i32
    %360 = tpu.dynamic_rotate %18 by %c255_i32 dim 1 : vector<1x256xf32>, i32 -> vector<1x256xf32>
    %361 = arith.mulf %360, %359 : vector<1x256xf32>
    %c255_i32_76 = arith.constant 255 : i32
    %362 = tpu.dynamic_rotate %19 by %c255_i32_76 dim 1 : vector<1x256xf32>, i32 -> vector<1x256xf32>
    %363 = arith.mulf %362, %359 : vector<1x256xf32>
    %c48_i32_77 = arith.constant 48 : i32
    %364 = tpu.dynamic_rotate %361 by %c48_i32_77 dim 1 : vector<1x256xf32>, i32 -> vector<1x256xf32>
    %c48_i32_78 = arith.constant 48 : i32
    %365 = tpu.dynamic_rotate %363 by %c48_i32_78 dim 1 : vector<1x256xf32>, i32 -> vector<1x256xf32>
    %366 = arith.mulf %364, %0 : vector<1x256xf32>
    %367 = arith.mulf %365, %0 : vector<1x256xf32>
    %c4_79 = arith.constant 4 : index
    %368 = memref.load %arg1[%c4_79] : memref<98xf32, #tpu.memory_space<smem>>
    %c53 = arith.constant 53 : index
    %369 = memref.load %arg1[%c53] : memref<98xf32, #tpu.memory_space<smem>>
    %370 = vector.broadcast %368 : f32 to vector<1x256xf32>
    %371 = arith.mulf %370, %366 : vector<1x256xf32>
    %372 = arith.addf %343, %371 : vector<1x256xf32>
    %373 = vector.broadcast %369 : f32 to vector<1x256xf32>
    %374 = arith.mulf %373, %367 : vector<1x256xf32>
    %375 = arith.addf %346, %374 : vector<1x256xf32>
    %c32_i32_80 = arith.constant 32 : i32
    %376 = tpu.dynamic_rotate %361 by %c32_i32_80 dim 1 : vector<1x256xf32>, i32 -> vector<1x256xf32>
    %c32_i32_81 = arith.constant 32 : i32
    %377 = tpu.dynamic_rotate %363 by %c32_i32_81 dim 1 : vector<1x256xf32>, i32 -> vector<1x256xf32>
    %378 = arith.mulf %376, %1 : vector<1x256xf32>
    %379 = arith.mulf %377, %1 : vector<1x256xf32>
    %c11_82 = arith.constant 11 : index
    %380 = memref.load %arg1[%c11_82] : memref<98xf32, #tpu.memory_space<smem>>
    %c60 = arith.constant 60 : index
    %381 = memref.load %arg1[%c60] : memref<98xf32, #tpu.memory_space<smem>>
    %382 = vector.broadcast %380 : f32 to vector<1x256xf32>
    %383 = arith.mulf %382, %378 : vector<1x256xf32>
    %384 = arith.addf %355, %383 : vector<1x256xf32>
    %385 = vector.broadcast %381 : f32 to vector<1x256xf32>
    %386 = arith.mulf %385, %379 : vector<1x256xf32>
    %387 = arith.addf %358, %386 : vector<1x256xf32>
    %c16_i32_83 = arith.constant 16 : i32
    %388 = tpu.dynamic_rotate %361 by %c16_i32_83 dim 1 : vector<1x256xf32>, i32 -> vector<1x256xf32>
    %c16_i32_84 = arith.constant 16 : i32
    %389 = tpu.dynamic_rotate %363 by %c16_i32_84 dim 1 : vector<1x256xf32>, i32 -> vector<1x256xf32>
    %390 = arith.mulf %388, %2 : vector<1x256xf32>
    %391 = arith.mulf %389, %2 : vector<1x256xf32>
    %c18 = arith.constant 18 : index
    %392 = memref.load %arg1[%c18] : memref<98xf32, #tpu.memory_space<smem>>
    %c67 = arith.constant 67 : index
    %393 = memref.load %arg1[%c67] : memref<98xf32, #tpu.memory_space<smem>>
    %394 = vector.broadcast %392 : f32 to vector<1x256xf32>
    %395 = arith.mulf %394, %390 : vector<1x256xf32>
    %396 = arith.addf %372, %395 : vector<1x256xf32>
    %397 = vector.broadcast %393 : f32 to vector<1x256xf32>
    %398 = arith.mulf %397, %391 : vector<1x256xf32>
    %399 = arith.addf %375, %398 : vector<1x256xf32>
    %c25 = arith.constant 25 : index
    %400 = memref.load %arg1[%c25] : memref<98xf32, #tpu.memory_space<smem>>
    %c74 = arith.constant 74 : index
    %401 = memref.load %arg1[%c74] : memref<98xf32, #tpu.memory_space<smem>>
    %402 = vector.broadcast %400 : f32 to vector<1x256xf32>
    %403 = arith.mulf %402, %361 : vector<1x256xf32>
    %404 = arith.addf %384, %403 : vector<1x256xf32>
    %405 = vector.broadcast %401 : f32 to vector<1x256xf32>
    %406 = arith.mulf %405, %363 : vector<1x256xf32>
    %407 = arith.addf %387, %406 : vector<1x256xf32>
    %c240_i32_85 = arith.constant 240 : i32
    %408 = tpu.dynamic_rotate %361 by %c240_i32_85 dim 1 : vector<1x256xf32>, i32 -> vector<1x256xf32>
    %c240_i32_86 = arith.constant 240 : i32
    %409 = tpu.dynamic_rotate %363 by %c240_i32_86 dim 1 : vector<1x256xf32>, i32 -> vector<1x256xf32>
    %410 = arith.mulf %408, %3 : vector<1x256xf32>
    %411 = arith.mulf %409, %3 : vector<1x256xf32>
    %c32 = arith.constant 32 : index
    %412 = memref.load %arg1[%c32] : memref<98xf32, #tpu.memory_space<smem>>
    %c81 = arith.constant 81 : index
    %413 = memref.load %arg1[%c81] : memref<98xf32, #tpu.memory_space<smem>>
    %414 = vector.broadcast %412 : f32 to vector<1x256xf32>
    %415 = arith.mulf %414, %410 : vector<1x256xf32>
    %416 = arith.addf %396, %415 : vector<1x256xf32>
    %417 = vector.broadcast %413 : f32 to vector<1x256xf32>
    %418 = arith.mulf %417, %411 : vector<1x256xf32>
    %419 = arith.addf %399, %418 : vector<1x256xf32>
    %c224_i32_87 = arith.constant 224 : i32
    %420 = tpu.dynamic_rotate %361 by %c224_i32_87 dim 1 : vector<1x256xf32>, i32 -> vector<1x256xf32>
    %c224_i32_88 = arith.constant 224 : i32
    %421 = tpu.dynamic_rotate %363 by %c224_i32_88 dim 1 : vector<1x256xf32>, i32 -> vector<1x256xf32>
    %422 = arith.mulf %420, %4 : vector<1x256xf32>
    %423 = arith.mulf %421, %4 : vector<1x256xf32>
    %c39 = arith.constant 39 : index
    %424 = memref.load %arg1[%c39] : memref<98xf32, #tpu.memory_space<smem>>
    %c88 = arith.constant 88 : index
    %425 = memref.load %arg1[%c88] : memref<98xf32, #tpu.memory_space<smem>>
    %426 = vector.broadcast %424 : f32 to vector<1x256xf32>
    %427 = arith.mulf %426, %422 : vector<1x256xf32>
    %428 = arith.addf %404, %427 : vector<1x256xf32>
    %429 = vector.broadcast %425 : f32 to vector<1x256xf32>
    %430 = arith.mulf %429, %423 : vector<1x256xf32>
    %431 = arith.addf %407, %430 : vector<1x256xf32>
    %c208_i32_89 = arith.constant 208 : i32
    %432 = tpu.dynamic_rotate %361 by %c208_i32_89 dim 1 : vector<1x256xf32>, i32 -> vector<1x256xf32>
    %c208_i32_90 = arith.constant 208 : i32
    %433 = tpu.dynamic_rotate %363 by %c208_i32_90 dim 1 : vector<1x256xf32>, i32 -> vector<1x256xf32>
    %434 = arith.mulf %432, %5 : vector<1x256xf32>
    %435 = arith.mulf %433, %5 : vector<1x256xf32>
    %c46 = arith.constant 46 : index
    %436 = memref.load %arg1[%c46] : memref<98xf32, #tpu.memory_space<smem>>
    %c95 = arith.constant 95 : index
    %437 = memref.load %arg1[%c95] : memref<98xf32, #tpu.memory_space<smem>>
    %438 = vector.broadcast %436 : f32 to vector<1x256xf32>
    %439 = arith.mulf %438, %434 : vector<1x256xf32>
    %440 = arith.addf %416, %439 : vector<1x256xf32>
    %441 = vector.broadcast %437 : f32 to vector<1x256xf32>
    %442 = arith.mulf %441, %435 : vector<1x256xf32>
    %443 = arith.addf %419, %442 : vector<1x256xf32>
    %c5 = arith.constant 5 : index
    %c0_91 = arith.constant 0 : index
    %444 = vector.load %arg2[%c5, %c0_91] : memref<14x256xf32, #tpu.memory_space<vmem>>, vector<1x256xf32>
    %c254_i32 = arith.constant 254 : i32
    %445 = tpu.dynamic_rotate %18 by %c254_i32 dim 1 : vector<1x256xf32>, i32 -> vector<1x256xf32>
    %446 = arith.mulf %445, %444 : vector<1x256xf32>
    %c254_i32_92 = arith.constant 254 : i32
    %447 = tpu.dynamic_rotate %19 by %c254_i32_92 dim 1 : vector<1x256xf32>, i32 -> vector<1x256xf32>
    %448 = arith.mulf %447, %444 : vector<1x256xf32>
    %c48_i32_93 = arith.constant 48 : i32
    %449 = tpu.dynamic_rotate %446 by %c48_i32_93 dim 1 : vector<1x256xf32>, i32 -> vector<1x256xf32>
    %c48_i32_94 = arith.constant 48 : i32
    %450 = tpu.dynamic_rotate %448 by %c48_i32_94 dim 1 : vector<1x256xf32>, i32 -> vector<1x256xf32>
    %451 = arith.mulf %449, %0 : vector<1x256xf32>
    %452 = arith.mulf %450, %0 : vector<1x256xf32>
    %c5_95 = arith.constant 5 : index
    %453 = memref.load %arg1[%c5_95] : memref<98xf32, #tpu.memory_space<smem>>
    %c54 = arith.constant 54 : index
    %454 = memref.load %arg1[%c54] : memref<98xf32, #tpu.memory_space<smem>>
    %455 = vector.broadcast %453 : f32 to vector<1x256xf32>
    %456 = arith.mulf %455, %451 : vector<1x256xf32>
    %457 = arith.addf %428, %456 : vector<1x256xf32>
    %458 = vector.broadcast %454 : f32 to vector<1x256xf32>
    %459 = arith.mulf %458, %452 : vector<1x256xf32>
    %460 = arith.addf %431, %459 : vector<1x256xf32>
    %c32_i32_96 = arith.constant 32 : i32
    %461 = tpu.dynamic_rotate %446 by %c32_i32_96 dim 1 : vector<1x256xf32>, i32 -> vector<1x256xf32>
    %c32_i32_97 = arith.constant 32 : i32
    %462 = tpu.dynamic_rotate %448 by %c32_i32_97 dim 1 : vector<1x256xf32>, i32 -> vector<1x256xf32>
    %463 = arith.mulf %461, %1 : vector<1x256xf32>
    %464 = arith.mulf %462, %1 : vector<1x256xf32>
    %c12_98 = arith.constant 12 : index
    %465 = memref.load %arg1[%c12_98] : memref<98xf32, #tpu.memory_space<smem>>
    %c61 = arith.constant 61 : index
    %466 = memref.load %arg1[%c61] : memref<98xf32, #tpu.memory_space<smem>>
    %467 = vector.broadcast %465 : f32 to vector<1x256xf32>
    %468 = arith.mulf %467, %463 : vector<1x256xf32>
    %469 = arith.addf %440, %468 : vector<1x256xf32>
    %470 = vector.broadcast %466 : f32 to vector<1x256xf32>
    %471 = arith.mulf %470, %464 : vector<1x256xf32>
    %472 = arith.addf %443, %471 : vector<1x256xf32>
    %c16_i32_99 = arith.constant 16 : i32
    %473 = tpu.dynamic_rotate %446 by %c16_i32_99 dim 1 : vector<1x256xf32>, i32 -> vector<1x256xf32>
    %c16_i32_100 = arith.constant 16 : i32
    %474 = tpu.dynamic_rotate %448 by %c16_i32_100 dim 1 : vector<1x256xf32>, i32 -> vector<1x256xf32>
    %475 = arith.mulf %473, %2 : vector<1x256xf32>
    %476 = arith.mulf %474, %2 : vector<1x256xf32>
    %c19 = arith.constant 19 : index
    %477 = memref.load %arg1[%c19] : memref<98xf32, #tpu.memory_space<smem>>
    %c68 = arith.constant 68 : index
    %478 = memref.load %arg1[%c68] : memref<98xf32, #tpu.memory_space<smem>>
    %479 = vector.broadcast %477 : f32 to vector<1x256xf32>
    %480 = arith.mulf %479, %475 : vector<1x256xf32>
    %481 = arith.addf %457, %480 : vector<1x256xf32>
    %482 = vector.broadcast %478 : f32 to vector<1x256xf32>
    %483 = arith.mulf %482, %476 : vector<1x256xf32>
    %484 = arith.addf %460, %483 : vector<1x256xf32>
    %c26 = arith.constant 26 : index
    %485 = memref.load %arg1[%c26] : memref<98xf32, #tpu.memory_space<smem>>
    %c75 = arith.constant 75 : index
    %486 = memref.load %arg1[%c75] : memref<98xf32, #tpu.memory_space<smem>>
    %487 = vector.broadcast %485 : f32 to vector<1x256xf32>
    %488 = arith.mulf %487, %446 : vector<1x256xf32>
    %489 = arith.addf %469, %488 : vector<1x256xf32>
    %490 = vector.broadcast %486 : f32 to vector<1x256xf32>
    %491 = arith.mulf %490, %448 : vector<1x256xf32>
    %492 = arith.addf %472, %491 : vector<1x256xf32>
    %c240_i32_101 = arith.constant 240 : i32
    %493 = tpu.dynamic_rotate %446 by %c240_i32_101 dim 1 : vector<1x256xf32>, i32 -> vector<1x256xf32>
    %c240_i32_102 = arith.constant 240 : i32
    %494 = tpu.dynamic_rotate %448 by %c240_i32_102 dim 1 : vector<1x256xf32>, i32 -> vector<1x256xf32>
    %495 = arith.mulf %493, %3 : vector<1x256xf32>
    %496 = arith.mulf %494, %3 : vector<1x256xf32>
    %c33 = arith.constant 33 : index
    %497 = memref.load %arg1[%c33] : memref<98xf32, #tpu.memory_space<smem>>
    %c82 = arith.constant 82 : index
    %498 = memref.load %arg1[%c82] : memref<98xf32, #tpu.memory_space<smem>>
    %499 = vector.broadcast %497 : f32 to vector<1x256xf32>
    %500 = arith.mulf %499, %495 : vector<1x256xf32>
    %501 = arith.addf %481, %500 : vector<1x256xf32>
    %502 = vector.broadcast %498 : f32 to vector<1x256xf32>
    %503 = arith.mulf %502, %496 : vector<1x256xf32>
    %504 = arith.addf %484, %503 : vector<1x256xf32>
    %c224_i32_103 = arith.constant 224 : i32
    %505 = tpu.dynamic_rotate %446 by %c224_i32_103 dim 1 : vector<1x256xf32>, i32 -> vector<1x256xf32>
    %c224_i32_104 = arith.constant 224 : i32
    %506 = tpu.dynamic_rotate %448 by %c224_i32_104 dim 1 : vector<1x256xf32>, i32 -> vector<1x256xf32>
    %507 = arith.mulf %505, %4 : vector<1x256xf32>
    %508 = arith.mulf %506, %4 : vector<1x256xf32>
    %c40 = arith.constant 40 : index
    %509 = memref.load %arg1[%c40] : memref<98xf32, #tpu.memory_space<smem>>
    %c89 = arith.constant 89 : index
    %510 = memref.load %arg1[%c89] : memref<98xf32, #tpu.memory_space<smem>>
    %511 = vector.broadcast %509 : f32 to vector<1x256xf32>
    %512 = arith.mulf %511, %507 : vector<1x256xf32>
    %513 = arith.addf %489, %512 : vector<1x256xf32>
    %514 = vector.broadcast %510 : f32 to vector<1x256xf32>
    %515 = arith.mulf %514, %508 : vector<1x256xf32>
    %516 = arith.addf %492, %515 : vector<1x256xf32>
    %c208_i32_105 = arith.constant 208 : i32
    %517 = tpu.dynamic_rotate %446 by %c208_i32_105 dim 1 : vector<1x256xf32>, i32 -> vector<1x256xf32>
    %c208_i32_106 = arith.constant 208 : i32
    %518 = tpu.dynamic_rotate %448 by %c208_i32_106 dim 1 : vector<1x256xf32>, i32 -> vector<1x256xf32>
    %519 = arith.mulf %517, %5 : vector<1x256xf32>
    %520 = arith.mulf %518, %5 : vector<1x256xf32>
    %c47 = arith.constant 47 : index
    %521 = memref.load %arg1[%c47] : memref<98xf32, #tpu.memory_space<smem>>
    %c96 = arith.constant 96 : index
    %522 = memref.load %arg1[%c96] : memref<98xf32, #tpu.memory_space<smem>>
    %523 = vector.broadcast %521 : f32 to vector<1x256xf32>
    %524 = arith.mulf %523, %519 : vector<1x256xf32>
    %525 = arith.addf %501, %524 : vector<1x256xf32>
    %526 = vector.broadcast %522 : f32 to vector<1x256xf32>
    %527 = arith.mulf %526, %520 : vector<1x256xf32>
    %528 = arith.addf %504, %527 : vector<1x256xf32>
    %c6 = arith.constant 6 : index
    %c0_107 = arith.constant 0 : index
    %529 = vector.load %arg2[%c6, %c0_107] : memref<14x256xf32, #tpu.memory_space<vmem>>, vector<1x256xf32>
    %c253_i32 = arith.constant 253 : i32
    %530 = tpu.dynamic_rotate %18 by %c253_i32 dim 1 : vector<1x256xf32>, i32 -> vector<1x256xf32>
    %531 = arith.mulf %530, %529 : vector<1x256xf32>
    %c253_i32_108 = arith.constant 253 : i32
    %532 = tpu.dynamic_rotate %19 by %c253_i32_108 dim 1 : vector<1x256xf32>, i32 -> vector<1x256xf32>
    %533 = arith.mulf %532, %529 : vector<1x256xf32>
    %c48_i32_109 = arith.constant 48 : i32
    %534 = tpu.dynamic_rotate %531 by %c48_i32_109 dim 1 : vector<1x256xf32>, i32 -> vector<1x256xf32>
    %c48_i32_110 = arith.constant 48 : i32
    %535 = tpu.dynamic_rotate %533 by %c48_i32_110 dim 1 : vector<1x256xf32>, i32 -> vector<1x256xf32>
    %536 = arith.mulf %534, %0 : vector<1x256xf32>
    %537 = arith.mulf %535, %0 : vector<1x256xf32>
    %c6_111 = arith.constant 6 : index
    %538 = memref.load %arg1[%c6_111] : memref<98xf32, #tpu.memory_space<smem>>
    %c55 = arith.constant 55 : index
    %539 = memref.load %arg1[%c55] : memref<98xf32, #tpu.memory_space<smem>>
    %540 = vector.broadcast %538 : f32 to vector<1x256xf32>
    %541 = arith.mulf %540, %536 : vector<1x256xf32>
    %542 = arith.addf %513, %541 : vector<1x256xf32>
    %543 = vector.broadcast %539 : f32 to vector<1x256xf32>
    %544 = arith.mulf %543, %537 : vector<1x256xf32>
    %545 = arith.addf %516, %544 : vector<1x256xf32>
    %c32_i32_112 = arith.constant 32 : i32
    %546 = tpu.dynamic_rotate %531 by %c32_i32_112 dim 1 : vector<1x256xf32>, i32 -> vector<1x256xf32>
    %c32_i32_113 = arith.constant 32 : i32
    %547 = tpu.dynamic_rotate %533 by %c32_i32_113 dim 1 : vector<1x256xf32>, i32 -> vector<1x256xf32>
    %548 = arith.mulf %546, %1 : vector<1x256xf32>
    %549 = arith.mulf %547, %1 : vector<1x256xf32>
    %c13_114 = arith.constant 13 : index
    %550 = memref.load %arg1[%c13_114] : memref<98xf32, #tpu.memory_space<smem>>
    %c62 = arith.constant 62 : index
    %551 = memref.load %arg1[%c62] : memref<98xf32, #tpu.memory_space<smem>>
    %552 = vector.broadcast %550 : f32 to vector<1x256xf32>
    %553 = arith.mulf %552, %548 : vector<1x256xf32>
    %554 = arith.addf %525, %553 : vector<1x256xf32>
    %555 = vector.broadcast %551 : f32 to vector<1x256xf32>
    %556 = arith.mulf %555, %549 : vector<1x256xf32>
    %557 = arith.addf %528, %556 : vector<1x256xf32>
    %c16_i32_115 = arith.constant 16 : i32
    %558 = tpu.dynamic_rotate %531 by %c16_i32_115 dim 1 : vector<1x256xf32>, i32 -> vector<1x256xf32>
    %c16_i32_116 = arith.constant 16 : i32
    %559 = tpu.dynamic_rotate %533 by %c16_i32_116 dim 1 : vector<1x256xf32>, i32 -> vector<1x256xf32>
    %560 = arith.mulf %558, %2 : vector<1x256xf32>
    %561 = arith.mulf %559, %2 : vector<1x256xf32>
    %c20 = arith.constant 20 : index
    %562 = memref.load %arg1[%c20] : memref<98xf32, #tpu.memory_space<smem>>
    %c69 = arith.constant 69 : index
    %563 = memref.load %arg1[%c69] : memref<98xf32, #tpu.memory_space<smem>>
    %564 = vector.broadcast %562 : f32 to vector<1x256xf32>
    %565 = arith.mulf %564, %560 : vector<1x256xf32>
    %566 = arith.addf %542, %565 : vector<1x256xf32>
    %567 = vector.broadcast %563 : f32 to vector<1x256xf32>
    %568 = arith.mulf %567, %561 : vector<1x256xf32>
    %569 = arith.addf %545, %568 : vector<1x256xf32>
    %c27 = arith.constant 27 : index
    %570 = memref.load %arg1[%c27] : memref<98xf32, #tpu.memory_space<smem>>
    %c76 = arith.constant 76 : index
    %571 = memref.load %arg1[%c76] : memref<98xf32, #tpu.memory_space<smem>>
    %572 = vector.broadcast %570 : f32 to vector<1x256xf32>
    %573 = arith.mulf %572, %531 : vector<1x256xf32>
    %574 = arith.addf %554, %573 : vector<1x256xf32>
    %575 = vector.broadcast %571 : f32 to vector<1x256xf32>
    %576 = arith.mulf %575, %533 : vector<1x256xf32>
    %577 = arith.addf %557, %576 : vector<1x256xf32>
    %c240_i32_117 = arith.constant 240 : i32
    %578 = tpu.dynamic_rotate %531 by %c240_i32_117 dim 1 : vector<1x256xf32>, i32 -> vector<1x256xf32>
    %c240_i32_118 = arith.constant 240 : i32
    %579 = tpu.dynamic_rotate %533 by %c240_i32_118 dim 1 : vector<1x256xf32>, i32 -> vector<1x256xf32>
    %580 = arith.mulf %578, %3 : vector<1x256xf32>
    %581 = arith.mulf %579, %3 : vector<1x256xf32>
    %c34 = arith.constant 34 : index
    %582 = memref.load %arg1[%c34] : memref<98xf32, #tpu.memory_space<smem>>
    %c83 = arith.constant 83 : index
    %583 = memref.load %arg1[%c83] : memref<98xf32, #tpu.memory_space<smem>>
    %584 = vector.broadcast %582 : f32 to vector<1x256xf32>
    %585 = arith.mulf %584, %580 : vector<1x256xf32>
    %586 = arith.addf %566, %585 : vector<1x256xf32>
    %587 = vector.broadcast %583 : f32 to vector<1x256xf32>
    %588 = arith.mulf %587, %581 : vector<1x256xf32>
    %589 = arith.addf %569, %588 : vector<1x256xf32>
    %c224_i32_119 = arith.constant 224 : i32
    %590 = tpu.dynamic_rotate %531 by %c224_i32_119 dim 1 : vector<1x256xf32>, i32 -> vector<1x256xf32>
    %c224_i32_120 = arith.constant 224 : i32
    %591 = tpu.dynamic_rotate %533 by %c224_i32_120 dim 1 : vector<1x256xf32>, i32 -> vector<1x256xf32>
    %592 = arith.mulf %590, %4 : vector<1x256xf32>
    %593 = arith.mulf %591, %4 : vector<1x256xf32>
    %c41 = arith.constant 41 : index
    %594 = memref.load %arg1[%c41] : memref<98xf32, #tpu.memory_space<smem>>
    %c90 = arith.constant 90 : index
    %595 = memref.load %arg1[%c90] : memref<98xf32, #tpu.memory_space<smem>>
    %596 = vector.broadcast %594 : f32 to vector<1x256xf32>
    %597 = arith.mulf %596, %592 : vector<1x256xf32>
    %598 = arith.addf %574, %597 : vector<1x256xf32>
    %599 = vector.broadcast %595 : f32 to vector<1x256xf32>
    %600 = arith.mulf %599, %593 : vector<1x256xf32>
    %601 = arith.addf %577, %600 : vector<1x256xf32>
    %c208_i32_121 = arith.constant 208 : i32
    %602 = tpu.dynamic_rotate %531 by %c208_i32_121 dim 1 : vector<1x256xf32>, i32 -> vector<1x256xf32>
    %c208_i32_122 = arith.constant 208 : i32
    %603 = tpu.dynamic_rotate %533 by %c208_i32_122 dim 1 : vector<1x256xf32>, i32 -> vector<1x256xf32>
    %604 = arith.mulf %602, %5 : vector<1x256xf32>
    %605 = arith.mulf %603, %5 : vector<1x256xf32>
    %c48 = arith.constant 48 : index
    %606 = memref.load %arg1[%c48] : memref<98xf32, #tpu.memory_space<smem>>
    %c97 = arith.constant 97 : index
    %607 = memref.load %arg1[%c97] : memref<98xf32, #tpu.memory_space<smem>>
    %608 = vector.broadcast %606 : f32 to vector<1x256xf32>
    %609 = arith.mulf %608, %604 : vector<1x256xf32>
    %610 = arith.addf %586, %609 : vector<1x256xf32>
    %611 = vector.broadcast %607 : f32 to vector<1x256xf32>
    %612 = arith.mulf %611, %605 : vector<1x256xf32>
    %613 = arith.addf %589, %612 : vector<1x256xf32>
    %614 = arith.addf %610, %613 : vector<1x256xf32>
    %615 = arith.addf %598, %601 : vector<1x256xf32>
    %616 = arith.addf %614, %615 : vector<1x256xf32>
    %617 = arith.negf %616 : vector<1x256xf32>
    %618 = math.exp %617 : vector<1x256xf32>
    %cst_123 = arith.constant 1.000000e+00 : f32
    %619 = vector.broadcast %cst_123 : f32 to vector<1x256xf32>
    %620 = arith.addf %619, %618 : vector<1x256xf32>
    %621 = arith.divf %619, %620 : vector<1x256xf32>
    %c0_124 = arith.constant 0 : index
    %c0_125 = arith.constant 0 : index
    %c0_126 = arith.constant 0 : index
    %622 = vector.load %arg4[%c0_124, %c0_125, %c0_126] : memref<1x1x256xf32, #tpu.memory_space<vmem>>, vector<1x1x256xf32>
    %623 = vector.shape_cast %622 : vector<1x1x256xf32> to vector<1x256xf32>
    %624 = vector.shape_cast %621 : vector<1x256xf32> to vector<1x1x256xf32>
    tpu.vector_store %arg4[%c0_124, %c0_125, %c0_126], %624 {strides = array<i32>} : memref<1x1x256xf32, #tpu.memory_space<vmem>>, vector<1x1x256xf32>,
    return
  }
  func.func @transform_0(%arg0: i32) -> i32 {
    %c0_i32 = arith.constant 0 : i32
    %c0_i32_0 = arith.constant 0 : i32
    return %c0_i32 : i32
  }
  func.func @transform_1(%arg0: i32) -> (i32, i32) {
    %c0_i32 = arith.constant 0 : i32
    %c0_i32_0 = arith.constant 0 : i32
    %c0_i32_1 = arith.constant 0 : i32
    return %c0_i32, %c0_i32_0 : i32, i32
  }
  func.func @transform_2(%arg0: i32) -> (i32, i32, i32) {
    %c0_i32 = arith.constant 0 : i32
    %c0_i32_0 = arith.constant 0 : i32
    %c0_i32_1 = arith.constant 0 : i32
    return %arg0, %c0_i32, %c0_i32_0 : i32, i32, i32
  }
  func.func @transform_3(%arg0: i32) -> (i32, i32, i32) {
    %c0_i32 = arith.constant 0 : i32
    %c0_i32_0 = arith.constant 0 : i32
    %c0_i32_1 = arith.constant 0 : i32
    return %arg0, %c0_i32, %c0_i32_0 : i32, i32, i32
  }
}

</mosaic_0001>

<llo_original>
// kernel: tpu_custom_call.1
$region0: #{tpu_custom_call.1}
  #allocation0 [shape = 'u32[]', space=smem, size = 0x4, offset = 0x4, fixed_abs, tag = 'smem constant byte address 0x4 - core index']
  #allocation1 [shape = 'u32[72,128]{1,0:T(1,128)}', space=vmem, size = 0x9000, scoped, tag = 'internal scratch']
  %s0 = inlined_call_operand.hbm [shape: f32[98], index: 0, kind: input, shape index: {}]
  %s1 = inlined_call_operand.hbm [shape: f32[14,256], index: 1, kind: input, shape index: {}]
  %s2 = inlined_call_operand.hbm [shape: f32[2,4,256], index: 2, kind: input, shape index: {}]
  %s3 = inlined_call_operand.hbm [shape: f32[2,1,256], index: 3, kind: output, shape index: {}]
  %s4 = sld [smem:[#allocation0]]
  $region57: #{tpu_custom_call.1} parent=0
    _
  %s6 = ssub.s32 1, %s4
  %s7 = scalar_select 0, %s6, %s4
  $region1: #{tpu_custom_call.1} parent=0
    #allocation2 [shape = 'u8[512]{0}', space=smem, size = 0x200, scoped, tag = 'input window, operand 0, single buffered']
    #allocation3 [shape = 's32[2]{0}', space=sflag, size = 0x8, scoped, tag = 'scoped memory for tpu_custom_call.1']
    #allocation4 [shape = 's32[2]{0}', space=sflag, size = 0x8, scoped, tag = 'scoped memory for tpu_custom_call.1']
    #allocation5 [shape = 's32[2]{0}', space=sflag, size = 0x8, scoped, tag = 'scoped memory for tpu_custom_call.1']
    #allocation6 [shape = 'u8[16384]{0}', space=vmem, size = 0x4000, scoped, tag = 'input window, operand 1, single buffered']
    #allocation7 [shape = 'u8[8192]{0}', space=vmem, size = 0x2000, scoped, tag = 'input window, operand 2']
    #allocation8 [shape = 's32[2]{0}', space=sflag, size = 0x8, scoped, tag = 'scoped memory for tpu_custom_call.1']
    #allocation9 [shape = 'u8[2048]{0}', space=vmem, size = 0x800, scoped, tag = 'output window, operand 0']
    %8 = vsyncpa [#allocation5], 0
    %9 = vsyncpa [#allocation3], 0
    %10 = vsyncpa [#allocation8], 0
    %s11 = scalar_lea.sflag [#allocation8], 1
    %12 = vsyncpa %s11, 0
    %13 = vsyncpa [#allocation4], 0
    %s14 = scalar_lea.sflag [#allocation4], 1
    %15 = vsyncpa %s14, 0
    loop: start=0, step=1, limit=4
    $region2: #{tpu_custom_call.1} parent=1 // loop_pre_header
      _
    $region3: #{tpu_custom_call.1} parent=1 // loop_header
      %s17 = sphi 0, %s21
      %p18 = scmp.ge.s32.totalorder %s17, 4
      %s25 = sphi 0, %s25
      %s27 = sphi 0, %s25
      %s28 = sphi 0, %s27
      %s42 = sphi 0, %s28
      %s46 = sphi 0, %s46
      %s48 = sphi 0, %s46
      %s49 = sphi 0, %s48
      %s63 = sphi 0, %s49
      %s69 = sphi 0, %s71
      %s72 = sphi 0, %s69
      %s73 = sphi 0, %s72
      %s89 = sphi 0, %s73
      %s95 = sphi 0, %s97
      %s98 = sphi 0, %s95
      %s99 = sphi 0, %s98
      %s115 = sphi 0, %s99
    $region4: #{tpu_custom_call.1} parent=1 // loop_header_branch
      %20 = sbr.rel (%p18) target = $region8
    $region5: #{tpu_custom_call.1} parent=1 // loop_body
      %s22 = ssub.s32 %s17, 1
      %s23 = ssub.s32 %s17, 2
      %s24 = sadd.s32 %s17, 1
      %s26 = sadd.s32 %s25, 1
      %p29 = scmp.eq.s32.totalorder %s17, 1
      %p30 = scmp.ne.s32.totalorder %s25, %s27
      %p31 = scmp.eq.s32.totalorder %s17, 0
      %p32 = por %p30, %p31
      %p33 = scmp.ne.s32.totalorder %s25, %s27
      %p34 = scmp.eq.s32.totalorder %s22, 1
      %p35 = por %p33, %p34
      %p36 = scmp.ne.s32.totalorder %s27, %s28
      %p37 = scmp.eq.s32.totalorder %s22, 0
      %p38 = por %p36, %p37
      %p39 = scmp.ne.s32.totalorder %s27, %s28
      %p40 = scmp.eq.s32.totalorder %s23, 1
      %p41 = por %p39, %p40
      %p43 = scmp.ne.s32.totalorder %s28, %s42
      %p44 = scmp.eq.s32.totalorder %s23, 0
      %p45 = por %p43, %p44
      %s47 = sadd.s32 %s46, 1
      %p50 = scmp.eq.s32.totalorder %s17, 1
      %p51 = scmp.ne.s32.totalorder %s46, %s48
      %p52 = scmp.eq.s32.totalorder %s17, 0
      %p53 = por %p51, %p52
      %p54 = scmp.ne.s32.totalorder %s46, %s48
      %p55 = scmp.eq.s32.totalorder %s22, 1
      %p56 = por %p54, %p55
      %p57 = scmp.ne.s32.totalorder %s48, %s49
      %p58 = scmp.eq.s32.totalorder %s22, 0
      %p59 = por %p57, %p58
      %p60 = scmp.ne.s32.totalorder %s48, %s49
      %p61 = scmp.eq.s32.totalorder %s23, 1
      %p62 = por %p60, %p61
      %p64 = scmp.ne.s32.totalorder %s49, %s63
      %p65 = scmp.eq.s32.totalorder %s23, 0
      %p66 = por %p64, %p65
      %s67 = ssub.s32 %s17, %s24
      %p68 = scmp.eq.s32.totalorder %s67, 0
      %s70 = sadd.s32 %s69, 1
      %s71 = scalar_select %p68, %s69, %s70
      %p74 = pneg %p68
      %p75 = scmp.eq.s32.totalorder %s17, 1
      %p76 = por %p74, %p75
      %p77 = scmp.ne.s32.totalorder %s69, %s72
      %p78 = scmp.eq.s32.totalorder %s17, 0
      %p79 = por %p77, %p78
      %p80 = scmp.ne.s32.totalorder %s69, %s72
      %p81 = scmp.eq.s32.totalorder %s22, 1
      %p82 = por %p80, %p81
      %p83 = scmp.ne.s32.totalorder %s72, %s73
      %p84 = scmp.eq.s32.totalorder %s22, 0
      %p85 = por %p83, %p84
      %p86 = scmp.ne.s32.totalorder %s72, %s73
      %p87 = scmp.eq.s32.totalorder %s23, 1
      %p88 = por %p86, %p87
      %p90 = scmp.ne.s32.totalorder %s73, %s89
      %p91 = scmp.eq.s32.totalorder %s23, 0
      %p92 = por %p90, %p91
      %s93 = ssub.s32 %s17, %s24
      %p94 = scmp.eq.s32.totalorder %s93, 0
      %s96 = sadd.s32 %s95, 1
      %s97 = scalar_select %p94, %s95, %s96
      %p100 = pneg %p94
      %p101 = scmp.eq.s32.totalorder %s17, 1
      %p102 = por %p100, %p101
      %p103 = scmp.ne.s32.totalorder %s95, %s98
      %p104 = scmp.eq.s32.totalorder %s17, 0
      %p105 = por %p103, %p104
      %p106 = scmp.ne.s32.totalorder %s95, %s98
      %p107 = scmp.eq.s32.totalorder %s22, 1
      %p108 = por %p106, %p107
      %p109 = scmp.ne.s32.totalorder %s98, %s99
      %p110 = scmp.eq.s32.totalorder %s22, 0
      %p111 = por %p109, %p110
      %p112 = scmp.ne.s32.totalorder %s98, %s99
      %p113 = scmp.eq.s32.totalorder %s23, 1
      %p114 = por %p112, %p113
      %p116 = scmp.ne.s32.totalorder %s99, %s115
      %p117 = scmp.eq.s32.totalorder %s23, 0
      %p118 = por %p116, %p117
      %p119 = scmp.le.s32.totalorder 1, %s17
      %p120 = scmp.lt.s32.totalorder %s17, 3
      %p121 = pnand %p119, %p120
      %p122 = pneg %p121
      // Predicated region
      $region9: #{tpu_custom_call.1} parent=5 // pred_check
        _
      $region10: #{tpu_custom_call.1} parent=5 // pred_check_branch
        %124 = sbr.rel (%p121) target = $region12
      $region11: #{tpu_custom_call.1} parent=5 // pred_region
        %s125 = ssub.s32 %s17, 1
        // Predicated region
        $region13: #{tpu_custom_call.1} parent=11 // pred_check
          %p126 = pneg %p38
        $region14: #{tpu_custom_call.1} parent=11 // pred_check_branch
          %128 = sbr.rel (%p126) target = $region16
        $region15: #{tpu_custom_call.1} parent=11 // pred_region
          %130 = vsyncadd [#allocation5], 0
          %s132 = sshll.u32 %s0, 4
          %s133 = int_to_ptr.hbm [resolvable:$true] %s132
          %135 = dma.hbm_to_smem %s133, 16, [#allocation2], [#allocation5]
        $region16: #{tpu_custom_call.1} parent=11 // pred_fallthru
          _
        // Predicated region
        $region17: #{tpu_custom_call.1} parent=11 // pred_check
          %p136 = pneg %p59
        $region18: #{tpu_custom_call.1} parent=11 // pred_check_branch
          %138 = sbr.rel (%p136) target = $region20
        $region19: #{tpu_custom_call.1} parent=11 // pred_region
          %140 = vsyncadd [#allocation3], 0
          %s141 = sshll.u32 %s1, 4
          %s142 = int_to_ptr.hbm [resolvable:$true] %s141
          %s143 = sshll.u32 [#allocation6], 4
          %s144 = int_to_ptr.vmem [resolvable:$true] %s143
          %149 = dma.hbm_to_vmem [thread:$0]  %s142, 512, %s144, [#allocation3], 256, 256, 16
        $region20: #{tpu_custom_call.1} parent=11 // pred_fallthru
          _
      $region12: #{tpu_custom_call.1} parent=5 // pred_fallthru
        _
      %p150 = scmp.lt.s32.totalorder %s17, 2
      // Predicated region
      $region21: #{tpu_custom_call.1} parent=5 // pred_check
        %p151 = pneg %p150
      $region22: #{tpu_custom_call.1} parent=5 // pred_check_branch
        %153 = sbr.rel (%p151) target = $region24
      $region23: #{tpu_custom_call.1} parent=5 // pred_region
        // Predicated region
        $region25: #{tpu_custom_call.1} parent=23 // pred_check
          %p154 = pneg %p79
        $region26: #{tpu_custom_call.1} parent=23 // pred_check_branch
          %156 = sbr.rel (%p154) target = $region28
        $region27: #{tpu_custom_call.1} parent=23 // pred_region
          %s157 = sand.u32 %s69, 1
          %s158 = scalar_lea.sflag [#allocation8], %s157
          %s159 = sand.u32 %s69, 1
          %s160 = smul.addr %s159, 8
          %s161 = scalar_lea.vmem [#allocation7], %s160
          %163 = vsyncadd %s158, 0
          %s164 = smul.addr %s17, 2
          %s165 = smul.addr %s164, 4
          %s166 = scalar_lea.hbm %s2, %s165
          %s168 = sshll.u32 %s166, 4
          %s169 = int_to_ptr.hbm [resolvable:$true] %s168
          %s170 = sshll.u32 %s161, 4
          %s171 = int_to_ptr.vmem [resolvable:$true] %s170
          %173 = dma.hbm_to_vmem [thread:$0]  %s169, 128, %s171, %s158
        $region28: #{tpu_custom_call.1} parent=23 // pred_fallthru
          _
      $region24: #{tpu_custom_call.1} parent=5 // pred_fallthru
        _
      %p174 = scmp.le.s32.totalorder 1, %s17
      %p175 = scmp.lt.s32.totalorder %s17, 3
      %p176 = pnand %p174, %p175
      %p177 = pneg %p176
      // Predicated region
      $region29: #{tpu_custom_call.1} parent=5 // pred_check
        _
      $region30: #{tpu_custom_call.1} parent=5 // pred_check_branch
        %179 = sbr.rel (%p176) target = $region32
      $region31: #{tpu_custom_call.1} parent=5 // pred_region
        %s180 = ssub.s32 %s17, 1
        // Predicated region
        $region33: #{tpu_custom_call.1} parent=31 // pred_check
          %p181 = pneg %p38
        $region34: #{tpu_custom_call.1} parent=31 // pred_check_branch
          %183 = sbr.rel (%p181) target = $region36
        $region35: #{tpu_custom_call.1} parent=31 // pred_region
          %185 = dma.done [#allocation5], 16
        $region36: #{tpu_custom_call.1} parent=31 // pred_fallthru
          _
        // Predicated region
        $region37: #{tpu_custom_call.1} parent=31 // pred_check
          %p186 = pneg %p59
        $region38: #{tpu_custom_call.1} parent=31 // pred_check_branch
          %188 = sbr.rel (%p186) target = $region40
        $region39: #{tpu_custom_call.1} parent=31 // pred_region
          %190 = dma.done [#allocation3], 512
        $region40: #{tpu_custom_call.1} parent=31 // pred_fallthru
          _
        %s191 = sand.u32 %s72, 1
        %s192 = scalar_lea.sflag [#allocation8], %s191
        %s193 = sand.u32 %s72, 1
        %s194 = smul.addr %s193, 8
        %s195 = scalar_lea.vmem [#allocation7], %s194
        // Predicated region
        $region41: #{tpu_custom_call.1} parent=31 // pred_check
          %p196 = pneg %p85
        $region42: #{tpu_custom_call.1} parent=31 // pred_check_branch
          %198 = sbr.rel (%p196) target = $region44
        $region43: #{tpu_custom_call.1} parent=31 // pred_region
          %200 = dma.done %s192, 128
        $region44: #{tpu_custom_call.1} parent=31 // pred_fallthru
          _
        %201 = sfence
        %p202 = pneg %p38
        %p203 = pneg %p35
        %p204 = pneg %p59
        %p205 = pneg %p56
        %s206 = sand.u32 %s72, 1
        %s207 = scalar_lea.sflag [#allocation8], %s206
        %s208 = sand.u32 %s72, 1
        %s209 = smul.addr %s208, 8
        %s210 = scalar_lea.vmem [#allocation7], %s209
        %p211 = pneg %p85
        %p212 = pneg %p82
        %p213 = pneg %p111
        %p214 = pneg %p108
        %s215 = sand.u32 %s98, 1
        %s216 = scalar_lea.sflag [#allocation4], %s215
        %s217 = sand.u32 %s98, 1
        %s218 = smul.addr %s217, 2
        %s219 = scalar_lea.vmem [#allocation9], %s218
        %s220 = scalar_lea.vmem [#allocation6], 7
        %v221 = vld [vmem:[%s220] ss:$8 sm:$0x3]
        %s222 = scalar_lea.vmem [#allocation6], 16
        %v223 = vld [vmem:[%s222] ss:$8 sm:$0x3]
        %s224 = scalar_lea.vmem [#allocation6], 17
        %v225 = vld [vmem:[%s224] ss:$8 sm:$0x3]
        %s226 = scalar_lea.vmem [#allocation6], 19
        %v227 = vld [vmem:[%s226] ss:$8 sm:$0x3]
        %s228 = scalar_lea.vmem [#allocation6], 20
        %v229 = vld [vmem:[%s228] ss:$8 sm:$0x3]
        %s230 = scalar_lea.vmem [#allocation6], 21
        %v231 = vld [vmem:[%s230] ss:$8 sm:$0x3]
        %v232 = vld [vmem:[%s195] ss:$4 sm:$0x3]
        %s233 = scalar_lea.vmem %s195, 1 [#allocation7]
        %v234 = vld [vmem:[%s233] ss:$4 sm:$0x3]
        %v235 = vadd.f32 %v232, %v234
        %v236 = vmax.f32 %v232, %v234
        %s237 = scalar_lea.vmem %s195, 2 [#allocation7]
        %v238 = vld [vmem:[%s237] ss:$4 sm:$0x3]
        %v239 = vadd.f32 %v235, %v238
        %v240 = vmax.f32 %v236, %v238
        %s241 = scalar_lea.vmem %s195, 3 [#allocation7]
        %v242 = vld [vmem:[%s241] ss:$4 sm:$0x3]
        %v243 = vadd.f32 %v239, %v242
        %v244 = vmax.f32 %v240, %v242
        %v245 = vld [vmem:[#allocation6] ss:$8 sm:$0x3]
        %v247 = vperm.slane %v243, 0
        %v248 = vperm.slane %v243, 1
        %251 = vrot.lane.b32.xlu0 %v247, 3
        %v252 = vpop.permute.xlu0 %251
        %253 = vrot.lane.b32.xlu0 %v248, 3
        %v254 = vpop.permute.xlu0 %253
        %v255 = vlaneseq
        %v256 = vand.u32 %v255, 127
        %vm257 = vcmp.lt.s32.totalorder %v256, 3
        %v258 = vsel %vm257, %v252, %v254
        %v259 = vsel %vm257, %v254, %v252
        %v261 = vperm.slane %v245, 0
        %v262 = vperm.slane %v245, 1
        %v265 = vmul.f32 %v259, %v261
        %v266 = vmul.f32 %v258, %v262
        %v268 = vperm.slane %v244, 0
        %v269 = vperm.slane %v244, 1
        %272 = vrot.lane.b32.xlu0 %v268, 3
        %v273 = vpop.permute.xlu0 %272
        %274 = vrot.lane.b32.xlu0 %v269, 3
        %v275 = vpop.permute.xlu0 %274
        %v276 = vsel %vm257, %v273, %v275
        %v277 = vsel %vm257, %v275, %v273
        %v278 = vmul.f32 %v277, %v261
        %v279 = vmul.f32 %v276, %v262
        %280 = vrot.lane.b32.xlu0 %v265, 48
        %v281 = vpop.permute.xlu0 %280
        %282 = vrot.lane.b32.xlu0 %v266, 48
        %v283 = vpop.permute.xlu0 %282
        %vm284 = vcmp.lt.s32.totalorder %v256, 48
        %v285 = vsel %vm284, %v281, %v283
        %v286 = vsel %vm284, %v283, %v281
        %287 = vrot.lane.b32.xlu0 %v278, 48
        %v288 = vpop.permute.xlu0 %287
        %289 = vrot.lane.b32.xlu0 %v279, 48
        %v290 = vpop.permute.xlu0 %289
        %v291 = vsel %vm284, %v288, %v290
        %v292 = vsel %vm284, %v290, %v288
        %v294 = vperm.slane %v221, 0
        %v295 = vperm.slane %v221, 1
        %v298 = vmul.f32 %v286, %v294
        %v299 = vmul.f32 %v285, %v295
        %v300 = vmul.f32 %v292, %v294
        %v301 = vmul.f32 %v291, %v295
        %s302 = sld [smem:[#allocation2]]
        %s303 = sld [smem:[#allocation2 + $0x31]]
        %v304 = vstv %s302
        %v305 = vmul.f32 %v304, %v298
        %v306 = vmul.f32 %v304, %v299
        %v307 = vadd.f32 %v305, 0.0
        %v308 = vadd.f32 %v306, 0.0
        %v309 = vstv %s303
        %v310 = vmul.f32 %v309, %v300
        %v311 = vmul.f32 %v309, %v301
        %v312 = vadd.f32 %v310, 0.0
        %v313 = vadd.f32 %v311, 0.0
        %314 = vrot.lane.b32.xlu0 %v265, 32
        %v315 = vpop.permute.xlu0 %314
        %316 = vrot.lane.b32.xlu0 %v266, 32
        %v317 = vpop.permute.xlu0 %316
        %vm318 = vcmp.lt.s32.totalorder %v256, 32
        %v319 = vsel %vm318, %v315, %v317
        %v320 = vsel %vm318, %v317, %v315
        %321 = vrot.lane.b32.xlu0 %v278, 32
        %v322 = vpop.permute.xlu0 %321
        %323 = vrot.lane.b32.xlu0 %v279, 32
        %v324 = vpop.permute.xlu0 %323
        %v325 = vsel %vm318, %v322, %v324
        %v326 = vsel %vm318, %v324, %v322
        %v328 = vperm.slane %v223, 0
        %v329 = vperm.slane %v223, 1
        %v332 = vmul.f32 %v320, %v328
        %v333 = vmul.f32 %v319, %v329
        %v334 = vmul.f32 %v326, %v328
        %v335 = vmul.f32 %v325, %v329
        %s336 = sld [smem:[#allocation2 + $0x7]]
        %s337 = sld [smem:[#allocation2 + $0x38]]
        %v338 = vstv %s336
        %v339 = vmul.f32 %v338, %v332
        %v340 = vmul.f32 %v338, %v333
        %v341 = vadd.f32 %v339, 0.0
        %v342 = vadd.f32 %v340, 0.0
        %v343 = vstv %s337
        %v344 = vmul.f32 %v343, %v334
        %v345 = vmul.f32 %v343, %v335
        %v346 = vadd.f32 %v344, 0.0
        %v347 = vadd.f32 %v345, 0.0
        %348 = vrot.lane.b32.xlu0 %v265, 16
        %v349 = vpop.permute.xlu0 %348
        %350 = vrot.lane.b32.xlu0 %v266, 16
        %v351 = vpop.permute.xlu0 %350
        %vm352 = vcmp.lt.s32.totalorder %v256, 16
        %v353 = vsel %vm352, %v349, %v351
        %v354 = vsel %vm352, %v351, %v349
        %355 = vrot.lane.b32.xlu0 %v278, 16
        %v356 = vpop.permute.xlu0 %355
        %357 = vrot.lane.b32.xlu0 %v279, 16
        %v358 = vpop.permute.xlu0 %357
        %v359 = vsel %vm352, %v356, %v358
        %v360 = vsel %vm352, %v358, %v356
        %v362 = vperm.slane %v225, 0
        %v363 = vperm.slane %v225, 1
        %v366 = vmul.f32 %v354, %v362
        %v367 = vmul.f32 %v353, %v363
        %v368 = vmul.f32 %v360, %v362
        %v369 = vmul.f32 %v359, %v363
        %s370 = sld [smem:[#allocation2 + $0xe]]
        %s371 = sld [smem:[#allocation2 + $0x3f]]
        %v372 = vstv %s370
        %v373 = vmul.f32 %v372, %v366
        %v374 = vmul.f32 %v372, %v367
        %v375 = vadd.f32 %v307, %v373
        %v376 = vadd.f32 %v308, %v374
        %v377 = vstv %s371
        %v378 = vmul.f32 %v377, %v368
        %v379 = vmul.f32 %v377, %v369
        %v380 = vadd.f32 %v312, %v378
        %v381 = vadd.f32 %v313, %v379
        %s382 = sld [smem:[#allocation2 + $0x15]]
        %s383 = sld [smem:[#allocation2 + $0x46]]
        %v384 = vstv %s382
        %v385 = vmul.f32 %v384, %v265
        %v386 = vmul.f32 %v384, %v266
        %v387 = vadd.f32 %v341, %v385
        %v388 = vadd.f32 %v342, %v386
        %v389 = vstv %s383
        %v390 = vmul.f32 %v389, %v278
        %v391 = vmul.f32 %v389, %v279
        %v392 = vadd.f32 %v346, %v390
        %v393 = vadd.f32 %v347, %v391
        %394 = vrot.lane.b32.xlu0 %v265, 112
        %v395 = vpop.permute.xlu0 %394
        %396 = vrot.lane.b32.xlu0 %v266, 112
        %v397 = vpop.permute.xlu0 %396
        %vm398 = vcmp.lt.s32.totalorder %v256, 112
        %v399 = vsel %vm398, %v395, %v397
        %v400 = vsel %vm398, %v397, %v395
        %401 = vrot.lane.b32.xlu0 %v278, 112
        %v402 = vpop.permute.xlu0 %401
        %403 = vrot.lane.b32.xlu0 %v279, 112
        %v404 = vpop.permute.xlu0 %403
        %v405 = vsel %vm398, %v402, %v404
        %v406 = vsel %vm398, %v404, %v402
        %v408 = vperm.slane %v227, 0
        %v409 = vperm.slane %v227, 1
        %v412 = vmul.f32 %v399, %v408
        %v413 = vmul.f32 %v400, %v409
        %v414 = vmul.f32 %v405, %v408
        %v415 = vmul.f32 %v406, %v409
        %s416 = sld [smem:[#allocation2 + $0x1c]]
        %s417 = sld [smem:[#allocation2 + $0x4d]]
        %v418 = vstv %s416
        %v419 = vmul.f32 %v418, %v412
        %v420 = vmul.f32 %v418, %v413
        %v421 = vadd.f32 %v375, %v419
        %v422 = vadd.f32 %v376, %v420
        %v423 = vstv %s417
        %v424 = vmul.f32 %v423, %v414
        %v425 = vmul.f32 %v423, %v415
        %v426 = vadd.f32 %v380, %v424
        %v427 = vadd.f32 %v381, %v425
        %428 = vrot.lane.b32.xlu0 %v265, 96
        %v429 = vpop.permute.xlu0 %428
        %430 = vrot.lane.b32.xlu0 %v266, 96
        %v431 = vpop.permute.xlu0 %430
        %vm432 = vcmp.lt.s32.totalorder %v256, 96
        %v433 = vsel %vm432, %v429, %v431
        %v434 = vsel %vm432, %v431, %v429
        %435 = vrot.lane.b32.xlu0 %v278, 96
        %v436 = vpop.permute.xlu0 %435
        %437 = vrot.lane.b32.xlu0 %v279, 96
        %v438 = vpop.permute.xlu0 %437
        %v439 = vsel %vm432, %v436, %v438
        %v440 = vsel %vm432, %v438, %v436
        %v442 = vperm.slane %v229, 0
        %v443 = vperm.slane %v229, 1
        %v446 = vmul.f32 %v433, %v442
        %v447 = vmul.f32 %v434, %v443
        %v448 = vmul.f32 %v439, %v442
        %v449 = vmul.f32 %v440, %v443
        %s450 = sld [smem:[#allocation2 + $0x23]]
        %s451 = sld [smem:[#allocation2 + $0x54]]
        %v452 = vstv %s450
        %v453 = vmul.f32 %v452, %v446
        %v454 = vmul.f32 %v452, %v447
        %v455 = vadd.f32 %v387, %v453
        %v456 = vadd.f32 %v388, %v454
        %v457 = vstv %s451
        %v458 = vmul.f32 %v457, %v448
        %v459 = vmul.f32 %v457, %v449
        %v460 = vadd.f32 %v392, %v458
        %v461 = vadd.f32 %v393, %v459
        %462 = vrot.lane.b32.xlu0 %v265, 80
        %v463 = vpop.permute.xlu0 %462
        %464 = vrot.lane.b32.xlu0 %v266, 80
        %v465 = vpop.permute.xlu0 %464
        %vm466 = vcmp.lt.s32.totalorder %v256, 80
        %v467 = vsel %vm466, %v463, %v465
        %v468 = vsel %vm466, %v465, %v463
        %469 = vrot.lane.b32.xlu0 %v278, 80
        %v470 = vpop.permute.xlu0 %469
        %471 = vrot.lane.b32.xlu0 %v279, 80
        %v472 = vpop.permute.xlu0 %471
        %v473 = vsel %vm466, %v470, %v472
        %v474 = vsel %vm466, %v472, %v470
        %v476 = vperm.slane %v231, 0
        %v477 = vperm.slane %v231, 1
        %v480 = vmul.f32 %v467, %v476
        %v481 = vmul.f32 %v468, %v477
        %v482 = vmul.f32 %v473, %v476
        %v483 = vmul.f32 %v474, %v477
        %s484 = sld [smem:[#allocation2 + $0x2a]]
        %s485 = sld [smem:[#allocation2 + $0x5b]]
        %v486 = vstv %s484
        %v487 = vmul.f32 %v486, %v480
        %v488 = vmul.f32 %v486, %v481
        %v489 = vadd.f32 %v421, %v487
        %v490 = vadd.f32 %v422, %v488
        %v491 = vstv %s485
        %v492 = vmul.f32 %v491, %v482
        %v493 = vmul.f32 %v491, %v483
        %v494 = vadd.f32 %v426, %v492
        %v495 = vadd.f32 %v427, %v493
        %s496 = scalar_lea.vmem [#allocation6], 1
        %v497 = vld [vmem:[%s496] ss:$8 sm:$0x3]
        %498 = vrot.lane.b32.xlu0 %v247, 2
        %v499 = vpop.permute.xlu0 %498
        %500 = vrot.lane.b32.xlu0 %v248, 2
        %v501 = vpop.permute.xlu0 %500
        %vm502 = vcmp.lt.s32.totalorder %v256, 2
        %v503 = vsel %vm502, %v499, %v501
        %v504 = vsel %vm502, %v501, %v499
        %v506 = vperm.slane %v497, 0
        %v507 = vperm.slane %v497, 1
        %v510 = vmul.f32 %v504, %v506
        %v511 = vmul.f32 %v503, %v507
        %512 = vrot.lane.b32.xlu0 %v268, 2
        %v513 = vpop.permute.xlu0 %512
        %514 = vrot.lane.b32.xlu0 %v269, 2
        %v515 = vpop.permute.xlu0 %514
        %v516 = vsel %vm502, %v513, %v515
        %v517 = vsel %vm502, %v515, %v513
        %v518 = vmul.f32 %v517, %v506
        %v519 = vmul.f32 %v516, %v507
        %520 = vrot.lane.b32.xlu0 %v510, 48
        %v521 = vpop.permute.xlu0 %520
        %522 = vrot.lane.b32.xlu0 %v511, 48
        %v523 = vpop.permute.xlu0 %522
        %v524 = vsel %vm284, %v521, %v523
        %v525 = vsel %vm284, %v523, %v521
        %526 = vrot.lane.b32.xlu0 %v518, 48
        %v527 = vpop.permute.xlu0 %526
        %528 = vrot.lane.b32.xlu0 %v519, 48
        %v529 = vpop.permute.xlu0 %528
        %v530 = vsel %vm284, %v527, %v529
        %v531 = vsel %vm284, %v529, %v527
        %v532 = vmul.f32 %v525, %v294
        %v533 = vmul.f32 %v524, %v295
        %v534 = vmul.f32 %v531, %v294
        %v535 = vmul.f32 %v530, %v295
        %s536 = sld [smem:[#allocation2 + $0x1]]
        %s537 = sld [smem:[#allocation2 + $0x32]]
        %v538 = vstv %s536
        %v539 = vmul.f32 %v538, %v532
        %v540 = vmul.f32 %v538, %v533
        %v541 = vadd.f32 %v455, %v539
        %v542 = vadd.f32 %v456, %v540
        %v543 = vstv %s537
        %v544 = vmul.f32 %v543, %v534
        %v545 = vmul.f32 %v543, %v535
        %v546 = vadd.f32 %v460, %v544
        %v547 = vadd.f32 %v461, %v545
        %548 = vrot.lane.b32.xlu0 %v510, 32
        %v549 = vpop.permute.xlu0 %548
        %550 = vrot.lane.b32.xlu0 %v511, 32
        %v551 = vpop.permute.xlu0 %550
        %v552 = vsel %vm318, %v549, %v551
        %v553 = vsel %vm318, %v551, %v549
        %554 = vrot.lane.b32.xlu0 %v518, 32
        %v555 = vpop.permute.xlu0 %554
        %556 = vrot.lane.b32.xlu0 %v519, 32
        %v557 = vpop.permute.xlu0 %556
        %v558 = vsel %vm318, %v555, %v557
        %v559 = vsel %vm318, %v557, %v555
        %v560 = vmul.f32 %v553, %v328
        %v561 = vmul.f32 %v552, %v329
        %v562 = vmul.f32 %v559, %v328
        %v563 = vmul.f32 %v558, %v329
        %s564 = sld [smem:[#allocation2 + $0x8]]
        %s565 = sld [smem:[#allocation2 + $0x39]]
        %v566 = vstv %s564
        %v567 = vmul.f32 %v566, %v560
        %v568 = vmul.f32 %v566, %v561
        %v569 = vadd.f32 %v489, %v567
        %v570 = vadd.f32 %v490, %v568
        %v571 = vstv %s565
        %v572 = vmul.f32 %v571, %v562
        %v573 = vmul.f32 %v571, %v563
        %v574 = vadd.f32 %v494, %v572
        %v575 = vadd.f32 %v495, %v573
        %576 = vrot.lane.b32.xlu0 %v510, 16
        %v577 = vpop.permute.xlu0 %576
        %578 = vrot.lane.b32.xlu0 %v511, 16
        %v579 = vpop.permute.xlu0 %578
        %v580 = vsel %vm352, %v577, %v579
        %v581 = vsel %vm352, %v579, %v577
        %582 = vrot.lane.b32.xlu0 %v518, 16
        %v583 = vpop.permute.xlu0 %582
        %584 = vrot.lane.b32.xlu0 %v519, 16
        %v585 = vpop.permute.xlu0 %584
        %v586 = vsel %vm352, %v583, %v585
        %v587 = vsel %vm352, %v585, %v583
        %v588 = vmul.f32 %v581, %v362
        %v589 = vmul.f32 %v580, %v363
        %v590 = vmul.f32 %v587, %v362
        %v591 = vmul.f32 %v586, %v363
        %s592 = sld [smem:[#allocation2 + $0xf]]
        %s593 = sld [smem:[#allocation2 + $0x40]]
        %v594 = vstv %s592
        %v595 = vmul.f32 %v594, %v588
        %v596 = vmul.f32 %v594, %v589
        %v597 = vadd.f32 %v541, %v595
        %v598 = vadd.f32 %v542, %v596
        %v599 = vstv %s593
        %v600 = vmul.f32 %v599, %v590
        %v601 = vmul.f32 %v599, %v591
        %v602 = vadd.f32 %v546, %v600
        %v603 = vadd.f32 %v547, %v601
        %s604 = sld [smem:[#allocation2 + $0x16]]
        %s605 = sld [smem:[#allocation2 + $0x47]]
        %v606 = vstv %s604
        %v607 = vmul.f32 %v606, %v510
        %v608 = vmul.f32 %v606, %v511
        %v609 = vadd.f32 %v569, %v607
        %v610 = vadd.f32 %v570, %v608
        %v611 = vstv %s605
        %v612 = vmul.f32 %v611, %v518
        %v613 = vmul.f32 %v611, %v519
        %v614 = vadd.f32 %v574, %v612
        %v615 = vadd.f32 %v575, %v613
        %616 = vrot.lane.b32.xlu0 %v510, 112
        %v617 = vpop.permute.xlu0 %616
        %618 = vrot.lane.b32.xlu0 %v511, 112
        %v619 = vpop.permute.xlu0 %618
        %v620 = vsel %vm398, %v617, %v619
        %v621 = vsel %vm398, %v619, %v617
        %622 = vrot.lane.b32.xlu0 %v518, 112
        %v623 = vpop.permute.xlu0 %622
        %624 = vrot.lane.b32.xlu0 %v519, 112
        %v625 = vpop.permute.xlu0 %624
        %v626 = vsel %vm398, %v623, %v625
        %v627 = vsel %vm398, %v625, %v623
        %v628 = vmul.f32 %v620, %v408
        %v629 = vmul.f32 %v621, %v409
        %v630 = vmul.f32 %v626, %v408
        %v631 = vmul.f32 %v627, %v409
        %s632 = sld [smem:[#allocation2 + $0x1d]]
        %s633 = sld [smem:[#allocation2 + $0x4e]]
        %v634 = vstv %s632
        %v635 = vmul.f32 %v634, %v628
        %v636 = vmul.f32 %v634, %v629
        %v637 = vadd.f32 %v597, %v635
        %v638 = vadd.f32 %v598, %v636
        %v639 = vstv %s633
        %v640 = vmul.f32 %v639, %v630
        %v641 = vmul.f32 %v639, %v631
        %v642 = vadd.f32 %v602, %v640
        %v643 = vadd.f32 %v603, %v641
        %644 = vrot.lane.b32.xlu0 %v510, 96
        %v645 = vpop.permute.xlu0 %644
        %646 = vrot.lane.b32.xlu0 %v511, 96
        %v647 = vpop.permute.xlu0 %646
        %v648 = vsel %vm432, %v645, %v647
        %v649 = vsel %vm432, %v647, %v645
        %650 = vrot.lane.b32.xlu0 %v518, 96
        %v651 = vpop.permute.xlu0 %650
        %652 = vrot.lane.b32.xlu0 %v519, 96
        %v653 = vpop.permute.xlu0 %652
        %v654 = vsel %vm432, %v651, %v653
        %v655 = vsel %vm432, %v653, %v651
        %v656 = vmul.f32 %v648, %v442
        %v657 = vmul.f32 %v649, %v443
        %v658 = vmul.f32 %v654, %v442
        %v659 = vmul.f32 %v655, %v443
        %s660 = sld [smem:[#allocation2 + $0x24]]
        %s661 = sld [smem:[#allocation2 + $0x55]]
        %v662 = vstv %s660
        %v663 = vmul.f32 %v662, %v656
        %v664 = vmul.f32 %v662, %v657
        %v665 = vadd.f32 %v609, %v663
        %v666 = vadd.f32 %v610, %v664
        %v667 = vstv %s661
        %v668 = vmul.f32 %v667, %v658
        %v669 = vmul.f32 %v667, %v659
        %v670 = vadd.f32 %v614, %v668
        %v671 = vadd.f32 %v615, %v669
        %672 = vrot.lane.b32.xlu0 %v510, 80
        %v673 = vpop.permute.xlu0 %672
        %674 = vrot.lane.b32.xlu0 %v511, 80
        %v675 = vpop.permute.xlu0 %674
        %v676 = vsel %vm466, %v673, %v675
        %v677 = vsel %vm466, %v675, %v673
        %678 = vrot.lane.b32.xlu0 %v518, 80
        %v679 = vpop.permute.xlu0 %678
        %680 = vrot.lane.b32.xlu0 %v519, 80
        %v681 = vpop.permute.xlu0 %680
        %v682 = vsel %vm466, %v679, %v681
        %v683 = vsel %vm466, %v681, %v679
        %v684 = vmul.f32 %v676, %v476
        %v685 = vmul.f32 %v677, %v477
        %v686 = vmul.f32 %v682, %v476
        %v687 = vmul.f32 %v683, %v477
        %s688 = sld [smem:[#allocation2 + $0x2b]]
        %s689 = sld [smem:[#allocation2 + $0x5c]]
        %v690 = vstv %s688
        %v691 = vmul.f32 %v690, %v684
        %v692 = vmul.f32 %v690, %v685
        %v693 = vadd.f32 %v637, %v691
        %v694 = vadd.f32 %v638, %v692
        %v695 = vstv %s689
        %v696 = vmul.f32 %v695, %v686
        %v697 = vmul.f32 %v695, %v687
        %v698 = vadd.f32 %v642, %v696
        %v699 = vadd.f32 %v643, %v697
        %s700 = scalar_lea.vmem [#allocation6], 2
        %v701 = vld [vmem:[%s700] ss:$8 sm:$0x3]
        %702 = vrot.lane.b32.xlu0 %v247, 1
        %v703 = vpop.permute.xlu0 %702
        %704 = vrot.lane.b32.xlu0 %v248, 1
        %v705 = vpop.permute.xlu0 %704
        %vm706 = vcmp.lt.s32.totalorder %v256, 1
        %v707 = vsel %vm706, %v703, %v705
        %v708 = vsel %vm706, %v705, %v703
        %v710 = vperm.slane %v701, 0
        %v711 = vperm.slane %v701, 1
        %v714 = vmul.f32 %v708, %v710
        %v715 = vmul.f32 %v707, %v711
        %716 = vrot.lane.b32.xlu0 %v268, 1
        %v717 = vpop.permute.xlu0 %716
        %718 = vrot.lane.b32.xlu0 %v269, 1
        %v719 = vpop.permute.xlu0 %718
        %v720 = vsel %vm706, %v717, %v719
        %v721 = vsel %vm706, %v719, %v717
        %v722 = vmul.f32 %v721, %v710
        %v723 = vmul.f32 %v720, %v711
        %724 = vrot.lane.b32.xlu0 %v714, 48
        %v725 = vpop.permute.xlu0 %724
        %726 = vrot.lane.b32.xlu0 %v715, 48
        %v727 = vpop.permute.xlu0 %726
        %v728 = vsel %vm284, %v725, %v727
        %v729 = vsel %vm284, %v727, %v725
        %730 = vrot.lane.b32.xlu0 %v722, 48
        %v731 = vpop.permute.xlu0 %730
        %732 = vrot.lane.b32.xlu0 %v723, 48
        %v733 = vpop.permute.xlu0 %732
        %v734 = vsel %vm284, %v731, %v733
        %v735 = vsel %vm284, %v733, %v731
        %v736 = vmul.f32 %v729, %v294
        %v737 = vmul.f32 %v728, %v295
        %v738 = vmul.f32 %v735, %v294
        %v739 = vmul.f32 %v734, %v295
        %s740 = sld [smem:[#allocation2 + $0x2]]
        %s741 = sld [smem:[#allocation2 + $0x33]]
        %v742 = vstv %s740
        %v743 = vmul.f32 %v742, %v736
        %v744 = vmul.f32 %v742, %v737
        %v745 = vadd.f32 %v665, %v743
        %v746 = vadd.f32 %v666, %v744
        %v747 = vstv %s741
        %v748 = vmul.f32 %v747, %v738
        %v749 = vmul.f32 %v747, %v739
        %v750 = vadd.f32 %v670, %v748
        %v751 = vadd.f32 %v671, %v749
        %752 = vrot.lane.b32.xlu0 %v714, 32
        %v753 = vpop.permute.xlu0 %752
        %754 = vrot.lane.b32.xlu0 %v715, 32
        %v755 = vpop.permute.xlu0 %754
        %v756 = vsel %vm318, %v753, %v755
        %v757 = vsel %vm318, %v755, %v753
        %758 = vrot.lane.b32.xlu0 %v722, 32
        %v759 = vpop.permute.xlu0 %758
        %760 = vrot.lane.b32.xlu0 %v723, 32
        %v761 = vpop.permute.xlu0 %760
        %v762 = vsel %vm318, %v759, %v761
        %v763 = vsel %vm318, %v761, %v759
        %v764 = vmul.f32 %v757, %v328
        %v765 = vmul.f32 %v756, %v329
        %v766 = vmul.f32 %v763, %v328
        %v767 = vmul.f32 %v762, %v329
        %s768 = sld [smem:[#allocation2 + $0x9]]
        %s769 = sld [smem:[#allocation2 + $0x3a]]
        %v770 = vstv %s768
        %v771 = vmul.f32 %v770, %v764
        %v772 = vmul.f32 %v770, %v765
        %v773 = vadd.f32 %v693, %v771
        %v774 = vadd.f32 %v694, %v772
        %v775 = vstv %s769
        %v776 = vmul.f32 %v775, %v766
        %v777 = vmul.f32 %v775, %v767
        %v778 = vadd.f32 %v698, %v776
        %v779 = vadd.f32 %v699, %v777
        %780 = vrot.lane.b32.xlu0 %v714, 16
        %v781 = vpop.permute.xlu0 %780
        %782 = vrot.lane.b32.xlu0 %v715, 16
        %v783 = vpop.permute.xlu0 %782
        %v784 = vsel %vm352, %v781, %v783
        %v785 = vsel %vm352, %v783, %v781
        %786 = vrot.lane.b32.xlu0 %v722, 16
        %v787 = vpop.permute.xlu0 %786
        %788 = vrot.lane.b32.xlu0 %v723, 16
        %v789 = vpop.permute.xlu0 %788
        %v790 = vsel %vm352, %v787, %v789
        %v791 = vsel %vm352, %v789, %v787
        %v792 = vmul.f32 %v785, %v362
        %v793 = vmul.f32 %v784, %v363
        %v794 = vmul.f32 %v791, %v362
        %v795 = vmul.f32 %v790, %v363
        %s796 = sld [smem:[#allocation2 + $0x10]]
        %s797 = sld [smem:[#allocation2 + $0x41]]
        %v798 = vstv %s796
        %v799 = vmul.f32 %v798, %v792
        %v800 = vmul.f32 %v798, %v793
        %v801 = vadd.f32 %v745, %v799
        %v802 = vadd.f32 %v746, %v800
        %v803 = vstv %s797
        %v804 = vmul.f32 %v803, %v794
        %v805 = vmul.f32 %v803, %v795
        %v806 = vadd.f32 %v750, %v804
        %v807 = vadd.f32 %v751, %v805
        %s808 = sld [smem:[#allocation2 + $0x17]]
        %s809 = sld [smem:[#allocation2 + $0x48]]
        %v810 = vstv %s808
        %v811 = vmul.f32 %v810, %v714
        %v812 = vmul.f32 %v810, %v715
        %v813 = vadd.f32 %v773, %v811
        %v814 = vadd.f32 %v774, %v812
        %v815 = vstv %s809
        %v816 = vmul.f32 %v815, %v722
        %v817 = vmul.f32 %v815, %v723
        %v818 = vadd.f32 %v778, %v816
        %v819 = vadd.f32 %v779, %v817
        %820 = vrot.lane.b32.xlu0 %v714, 112
        %v821 = vpop.permute.xlu0 %820
        %822 = vrot.lane.b32.xlu0 %v715, 112
        %v823 = vpop.permute.xlu0 %822
        %v824 = vsel %vm398, %v821, %v823
        %v825 = vsel %vm398, %v823, %v821
        %826 = vrot.lane.b32.xlu0 %v722, 112
        %v827 = vpop.permute.xlu0 %826
        %828 = vrot.lane.b32.xlu0 %v723, 112
        %v829 = vpop.permute.xlu0 %828
        %v830 = vsel %vm398, %v827, %v829
        %v831 = vsel %vm398, %v829, %v827
        %v832 = vmul.f32 %v824, %v408
        %v833 = vmul.f32 %v825, %v409
        %v834 = vmul.f32 %v830, %v408
        %v835 = vmul.f32 %v831, %v409
        %s836 = sld [smem:[#allocation2 + $0x1e]]
        %s837 = sld [smem:[#allocation2 + $0x4f]]
        %v838 = vstv %s836
        %v839 = vmul.f32 %v838, %v832
        %v840 = vmul.f32 %v838, %v833
        %v841 = vadd.f32 %v801, %v839
        %v842 = vadd.f32 %v802, %v840
        %v843 = vstv %s837
        %v844 = vmul.f32 %v843, %v834
        %v845 = vmul.f32 %v843, %v835
        %v846 = vadd.f32 %v806, %v844
        %v847 = vadd.f32 %v807, %v845
        %848 = vrot.lane.b32.xlu0 %v714, 96
        %v849 = vpop.permute.xlu0 %848
        %850 = vrot.lane.b32.xlu0 %v715, 96
        %v851 = vpop.permute.xlu0 %850
        %v852 = vsel %vm432, %v849, %v851
        %v853 = vsel %vm432, %v851, %v849
        %854 = vrot.lane.b32.xlu0 %v722, 96
        %v855 = vpop.permute.xlu0 %854
        %856 = vrot.lane.b32.xlu0 %v723, 96
        %v857 = vpop.permute.xlu0 %856
        %v858 = vsel %vm432, %v855, %v857
        %v859 = vsel %vm432, %v857, %v855
        %v860 = vmul.f32 %v852, %v442
        %v861 = vmul.f32 %v853, %v443
        %v862 = vmul.f32 %v858, %v442
        %v863 = vmul.f32 %v859, %v443
        %s864 = sld [smem:[#allocation2 + $0x25]]
        %s865 = sld [smem:[#allocation2 + $0x56]]
        %v866 = vstv %s864
        %v867 = vmul.f32 %v866, %v860
        %v868 = vmul.f32 %v866, %v861
        %v869 = vadd.f32 %v813, %v867
        %v870 = vadd.f32 %v814, %v868
        %v871 = vstv %s865
        %v872 = vmul.f32 %v871, %v862
        %v873 = vmul.f32 %v871, %v863
        %v874 = vadd.f32 %v818, %v872
        %v875 = vadd.f32 %v819, %v873
        %876 = vrot.lane.b32.xlu0 %v714, 80
        %v877 = vpop.permute.xlu0 %876
        %878 = vrot.lane.b32.xlu0 %v715, 80
        %v879 = vpop.permute.xlu0 %878
        %v880 = vsel %vm466, %v877, %v879
        %v881 = vsel %vm466, %v879, %v877
        %882 = vrot.lane.b32.xlu0 %v722, 80
        %v883 = vpop.permute.xlu0 %882
        %884 = vrot.lane.b32.xlu0 %v723, 80
        %v885 = vpop.permute.xlu0 %884
        %v886 = vsel %vm466, %v883, %v885
        %v887 = vsel %vm466, %v885, %v883
        %v888 = vmul.f32 %v880, %v476
        %v889 = vmul.f32 %v881, %v477
        %v890 = vmul.f32 %v886, %v476
        %v891 = vmul.f32 %v887, %v477
        %s892 = sld [smem:[#allocation2 + $0x2c]]
        %s893 = sld [smem:[#allocation2 + $0x5d]]
        %v894 = vstv %s892
        %v895 = vmul.f32 %v894, %v888
        %v896 = vmul.f32 %v894, %v889
        %v897 = vadd.f32 %v841, %v895
        %v898 = vadd.f32 %v842, %v896
        %v899 = vstv %s893
        %v900 = vmul.f32 %v899, %v890
        %v901 = vmul.f32 %v899, %v891
        %v902 = vadd.f32 %v846, %v900
        %v903 = vadd.f32 %v847, %v901
        %904 = vrot.lane.b32.xlu0 %v247, 48
        %v905 = vpop.permute.xlu0 %904
        %906 = vrot.lane.b32.xlu0 %v248, 48
        %v907 = vpop.permute.xlu0 %906
        %v908 = vsel %vm284, %v905, %v907
        %v909 = vsel %vm284, %v907, %v905
        %910 = vrot.lane.b32.xlu0 %v268, 48
        %v911 = vpop.permute.xlu0 %910
        %912 = vrot.lane.b32.xlu0 %v269, 48
        %v913 = vpop.permute.xlu0 %912
        %v914 = vsel %vm284, %v911, %v913
        %v915 = vsel %vm284, %v913, %v911
        %v916 = vmul.f32 %v909, %v294
        %v917 = vmul.f32 %v908, %v295
        %v918 = vmul.f32 %v915, %v294
        %v919 = vmul.f32 %v914, %v295
        %s920 = sld [smem:[#allocation2 + $0x3]]
        %s921 = sld [smem:[#allocation2 + $0x34]]
        %v922 = vstv %s920
        %v923 = vmul.f32 %v922, %v916
        %v924 = vmul.f32 %v922, %v917
        %v925 = vadd.f32 %v869, %v923
        %v926 = vadd.f32 %v870, %v924
        %v927 = vstv %s921
        %v928 = vmul.f32 %v927, %v918
        %v929 = vmul.f32 %v927, %v919
        %v930 = vadd.f32 %v874, %v928
        %v931 = vadd.f32 %v875, %v929
        %932 = vrot.lane.b32.xlu0 %v247, 32
        %v933 = vpop.permute.xlu0 %932
        %934 = vrot.lane.b32.xlu0 %v248, 32
        %v935 = vpop.permute.xlu0 %934
        %v936 = vsel %vm318, %v933, %v935
        %v937 = vsel %vm318, %v935, %v933
        %938 = vrot.lane.b32.xlu0 %v268, 32
        %v939 = vpop.permute.xlu0 %938
        %940 = vrot.lane.b32.xlu0 %v269, 32
        %v941 = vpop.permute.xlu0 %940
        %v942 = vsel %vm318, %v939, %v941
        %v943 = vsel %vm318, %v941, %v939
        %v944 = vmul.f32 %v937, %v328
        %v945 = vmul.f32 %v936, %v329
        %v946 = vmul.f32 %v943, %v328
        %v947 = vmul.f32 %v942, %v329
        %s948 = sld [smem:[#allocation2 + $0xa]]
        %s949 = sld [smem:[#allocation2 + $0x3b]]
        %v950 = vstv %s948
        %v951 = vmul.f32 %v950, %v944
        %v952 = vmul.f32 %v950, %v945
        %v953 = vadd.f32 %v897, %v951
        %v954 = vadd.f32 %v898, %v952
        %v955 = vstv %s949
        %v956 = vmul.f32 %v955, %v946
        %v957 = vmul.f32 %v955, %v947
        %v958 = vadd.f32 %v902, %v956
        %v959 = vadd.f32 %v903, %v957
        %960 = vrot.lane.b32.xlu0 %v247, 16
        %v961 = vpop.permute.xlu0 %960
        %962 = vrot.lane.b32.xlu0 %v248, 16
        %v963 = vpop.permute.xlu0 %962
        %v964 = vsel %vm352, %v961, %v963
        %v965 = vsel %vm352, %v963, %v961
        %966 = vrot.lane.b32.xlu0 %v268, 16
        %v967 = vpop.permute.xlu0 %966
        %968 = vrot.lane.b32.xlu0 %v269, 16
        %v969 = vpop.permute.xlu0 %968
        %v970 = vsel %vm352, %v967, %v969
        %v971 = vsel %vm352, %v969, %v967
        %v972 = vmul.f32 %v965, %v362
        %v973 = vmul.f32 %v964, %v363
        %v974 = vmul.f32 %v971, %v362
        %v975 = vmul.f32 %v970, %v363
        %s976 = sld [smem:[#allocation2 + $0x11]]
        %s977 = sld [smem:[#allocation2 + $0x42]]
        %v978 = vstv %s976
        %v979 = vmul.f32 %v978, %v972
        %v980 = vmul.f32 %v978, %v973
        %v981 = vadd.f32 %v925, %v979
        %v982 = vadd.f32 %v926, %v980
        %v983 = vstv %s977
        %v984 = vmul.f32 %v983, %v974
        %v985 = vmul.f32 %v983, %v975
        %v986 = vadd.f32 %v930, %v984
        %v987 = vadd.f32 %v931, %v985
        %s988 = sld [smem:[#allocation2 + $0x18]]
        %s989 = sld [smem:[#allocation2 + $0x49]]
        %v990 = vstv %s988
        %v991 = vmul.f32 %v990, %v243
        %v993 = vperm.slane %v991, 0
        %v994 = vperm.slane %v991, 1
        %v997 = vadd.f32 %v953, %v993
        %v998 = vadd.f32 %v954, %v994
        %v999 = vstv %s989
        %v1000 = vmul.f32 %v999, %v244
        %v1002 = vperm.slane %v1000, 0
        %v1003 = vperm.slane %v1000, 1
        %v1006 = vadd.f32 %v958, %v1002
        %v1007 = vadd.f32 %v959, %v1003
        %1008 = vrot.lane.b32.xlu0 %v247, 112
        %v1009 = vpop.permute.xlu0 %1008
        %1010 = vrot.lane.b32.xlu0 %v248, 112
        %v1011 = vpop.permute.xlu0 %1010
        %v1012 = vsel %vm398, %v1009, %v1011
        %v1013 = vsel %vm398, %v1011, %v1009
        %1014 = vrot.lane.b32.xlu0 %v268, 112
        %v1015 = vpop.permute.xlu0 %1014
        %1016 = vrot.lane.b32.xlu0 %v269, 112
        %v1017 = vpop.permute.xlu0 %1016
        %v1018 = vsel %vm398, %v1015, %v1017
        %v1019 = vsel %vm398, %v1017, %v1015
        %v1020 = vmul.f32 %v1012, %v408
        %v1021 = vmul.f32 %v1013, %v409
        %v1022 = vmul.f32 %v1018, %v408
        %v1023 = vmul.f32 %v1019, %v409
        %s1024 = sld [smem:[#allocation2 + $0x1f]]
        %s1025 = sld [smem:[#allocation2 + $0x50]]
        %v1026 = vstv %s1024
        %v1027 = vmul.f32 %v1026, %v1020
        %v1028 = vmul.f32 %v1026, %v1021
        %v1029 = vadd.f32 %v981, %v1027
        %v1030 = vadd.f32 %v982, %v1028
        %v1031 = vstv %s1025
        %v1032 = vmul.f32 %v1031, %v1022
        %v1033 = vmul.f32 %v1031, %v1023
        %v1034 = vadd.f32 %v986, %v1032
        %v1035 = vadd.f32 %v987, %v1033
        %1036 = vrot.lane.b32.xlu0 %v247, 96
        %v1037 = vpop.permute.xlu0 %1036
        %1038 = vrot.lane.b32.xlu0 %v248, 96
        %v1039 = vpop.permute.xlu0 %1038
        %v1040 = vsel %vm432, %v1037, %v1039
        %v1041 = vsel %vm432, %v1039, %v1037
        %1042 = vrot.lane.b32.xlu0 %v268, 96
        %v1043 = vpop.permute.xlu0 %1042
        %1044 = vrot.lane.b32.xlu0 %v269, 96
        %v1045 = vpop.permute.xlu0 %1044
        %v1046 = vsel %vm432, %v1043, %v1045
        %v1047 = vsel %vm432, %v1045, %v1043
        %v1048 = vmul.f32 %v1040, %v442
        %v1049 = vmul.f32 %v1041, %v443
        %v1050 = vmul.f32 %v1046, %v442
        %v1051 = vmul.f32 %v1047, %v443
        %s1052 = sld [smem:[#allocation2 + $0x26]]
        %s1053 = sld [smem:[#allocation2 + $0x57]]
        %v1054 = vstv %s1052
        %v1055 = vmul.f32 %v1054, %v1048
        %v1056 = vmul.f32 %v1054, %v1049
        %v1057 = vadd.f32 %v997, %v1055
        %v1058 = vadd.f32 %v998, %v1056
        %v1059 = vstv %s1053
        %v1060 = vmul.f32 %v1059, %v1050
        %v1061 = vmul.f32 %v1059, %v1051
        %v1062 = vadd.f32 %v1006, %v1060
        %v1063 = vadd.f32 %v1007, %v1061
        %1064 = vrot.lane.b32.xlu0 %v247, 80
        %v1065 = vpop.permute.xlu0 %1064
        %1066 = vrot.lane.b32.xlu0 %v248, 80
        %v1067 = vpop.permute.xlu0 %1066
        %v1068 = vsel %vm466, %v1065, %v1067
        %v1069 = vsel %vm466, %v1067, %v1065
        %1070 = vrot.lane.b32.xlu0 %v268, 80
        %v1071 = vpop.permute.xlu0 %1070
        %1072 = vrot.lane.b32.xlu0 %v269, 80
        %v1073 = vpop.permute.xlu0 %1072
        %v1074 = vsel %vm466, %v1071, %v1073
        %v1075 = vsel %vm466, %v1073, %v1071
        %v1076 = vmul.f32 %v1068, %v476
        %v1077 = vmul.f32 %v1069, %v477
        %v1078 = vmul.f32 %v1074, %v476
        %v1079 = vmul.f32 %v1075, %v477
        %s1080 = sld [smem:[#allocation2 + $0x2d]]
        %s1081 = sld [smem:[#allocation2 + $0x5e]]
        %v1082 = vstv %s1080
        %v1083 = vmul.f32 %v1082, %v1076
        %v1084 = vmul.f32 %v1082, %v1077
        %v1085 = vadd.f32 %v1029, %v1083
        %v1086 = vadd.f32 %v1030, %v1084
        %v1087 = vstv %s1081
        %v1088 = vmul.f32 %v1087, %v1078
        %v1089 = vmul.f32 %v1087, %v1079
        %v1090 = vadd.f32 %v1034, %v1088
        %v1091 = vadd.f32 %v1035, %v1089
        %s1092 = scalar_lea.vmem [#allocation6], 4
        %v1093 = vld [vmem:[%s1092] ss:$8 sm:$0x3]
        %1094 = vrot.lane.b32.xlu0 %v247, 127
        %v1095 = vpop.permute.xlu0 %1094
        %1096 = vrot.lane.b32.xlu0 %v248, 127
        %v1097 = vpop.permute.xlu0 %1096
        %vm1098 = vcmp.lt.s32.totalorder %v256, 127
        %v1099 = vsel %vm1098, %v1095, %v1097
        %v1100 = vsel %vm1098, %v1097, %v1095
        %v1102 = vperm.slane %v1093, 0
        %v1103 = vperm.slane %v1093, 1
        %v1106 = vmul.f32 %v1099, %v1102
        %v1107 = vmul.f32 %v1100, %v1103
        %1108 = vrot.lane.b32.xlu0 %v268, 127
        %v1109 = vpop.permute.xlu0 %1108
        %1110 = vrot.lane.b32.xlu0 %v269, 127
        %v1111 = vpop.permute.xlu0 %1110
        %v1112 = vsel %vm1098, %v1109, %v1111
        %v1113 = vsel %vm1098, %v1111, %v1109
        %v1114 = vmul.f32 %v1112, %v1102
        %v1115 = vmul.f32 %v1113, %v1103
        %1116 = vrot.lane.b32.xlu0 %v1106, 48
        %v1117 = vpop.permute.xlu0 %1116
        %1118 = vrot.lane.b32.xlu0 %v1107, 48
        %v1119 = vpop.permute.xlu0 %1118
        %v1120 = vsel %vm284, %v1117, %v1119
        %v1121 = vsel %vm284, %v1119, %v1117
        %1122 = vrot.lane.b32.xlu0 %v1114, 48
        %v1123 = vpop.permute.xlu0 %1122
        %1124 = vrot.lane.b32.xlu0 %v1115, 48
        %v1125 = vpop.permute.xlu0 %1124
        %v1126 = vsel %vm284, %v1123, %v1125
        %v1127 = vsel %vm284, %v1125, %v1123
        %v1128 = vmul.f32 %v1121, %v294
        %v1129 = vmul.f32 %v1120, %v295
        %v1130 = vmul.f32 %v1127, %v294
        %v1131 = vmul.f32 %v1126, %v295
        %s1132 = sld [smem:[#allocation2 + $0x4]]
        %s1133 = sld [smem:[#allocation2 + $0x35]]
        %v1134 = vstv %s1132
        %v1135 = vmul.f32 %v1134, %v1128
        %v1136 = vmul.f32 %v1134, %v1129
        %v1137 = vadd.f32 %v1057, %v1135
        %v1138 = vadd.f32 %v1058, %v1136
        %v1139 = vstv %s1133
        %v1140 = vmul.f32 %v1139, %v1130
        %v1141 = vmul.f32 %v1139, %v1131
        %v1142 = vadd.f32 %v1062, %v1140
        %v1143 = vadd.f32 %v1063, %v1141
        %1144 = vrot.lane.b32.xlu0 %v1106, 32
        %v1145 = vpop.permute.xlu0 %1144
        %1146 = vrot.lane.b32.xlu0 %v1107, 32
        %v1147 = vpop.permute.xlu0 %1146
        %v1148 = vsel %vm318, %v1145, %v1147
        %v1149 = vsel %vm318, %v1147, %v1145
        %1150 = vrot.lane.b32.xlu0 %v1114, 32
        %v1151 = vpop.permute.xlu0 %1150
        %1152 = vrot.lane.b32.xlu0 %v1115, 32
        %v1153 = vpop.permute.xlu0 %1152
        %v1154 = vsel %vm318, %v1151, %v1153
        %v1155 = vsel %vm318, %v1153, %v1151
        %v1156 = vmul.f32 %v1149, %v328
        %v1157 = vmul.f32 %v1148, %v329
        %v1158 = vmul.f32 %v1155, %v328
        %v1159 = vmul.f32 %v1154, %v329
        %s1160 = sld [smem:[#allocation2 + $0xb]]
        %s1161 = sld [smem:[#allocation2 + $0x3c]]
        %v1162 = vstv %s1160
        %v1163 = vmul.f32 %v1162, %v1156
        %v1164 = vmul.f32 %v1162, %v1157
        %v1165 = vadd.f32 %v1085, %v1163
        %v1166 = vadd.f32 %v1086, %v1164
        %v1167 = vstv %s1161
        %v1168 = vmul.f32 %v1167, %v1158
        %v1169 = vmul.f32 %v1167, %v1159
        %v1170 = vadd.f32 %v1090, %v1168
        %v1171 = vadd.f32 %v1091, %v1169
        %1172 = vrot.lane.b32.xlu0 %v1106, 16
        %v1173 = vpop.permute.xlu0 %1172
        %1174 = vrot.lane.b32.xlu0 %v1107, 16
        %v1175 = vpop.permute.xlu0 %1174
        %v1176 = vsel %vm352, %v1173, %v1175
        %v1177 = vsel %vm352, %v1175, %v1173
        %1178 = vrot.lane.b32.xlu0 %v1114, 16
        %v1179 = vpop.permute.xlu0 %1178
        %1180 = vrot.lane.b32.xlu0 %v1115, 16
        %v1181 = vpop.permute.xlu0 %1180
        %v1182 = vsel %vm352, %v1179, %v1181
        %v1183 = vsel %vm352, %v1181, %v1179
        %v1184 = vmul.f32 %v1177, %v362
        %v1185 = vmul.f32 %v1176, %v363
        %v1186 = vmul.f32 %v1183, %v362
        %v1187 = vmul.f32 %v1182, %v363
        %s1188 = sld [smem:[#allocation2 + $0x12]]
        %s1189 = sld [smem:[#allocation2 + $0x43]]
        %v1190 = vstv %s1188
        %v1191 = vmul.f32 %v1190, %v1184
        %v1192 = vmul.f32 %v1190, %v1185
        %v1193 = vadd.f32 %v1137, %v1191
        %v1194 = vadd.f32 %v1138, %v1192
        %v1195 = vstv %s1189
        %v1196 = vmul.f32 %v1195, %v1186
        %v1197 = vmul.f32 %v1195, %v1187
        %v1198 = vadd.f32 %v1142, %v1196
        %v1199 = vadd.f32 %v1143, %v1197
        %s1200 = sld [smem:[#allocation2 + $0x19]]
        %s1201 = sld [smem:[#allocation2 + $0x4a]]
        %v1202 = vstv %s1200
        %v1203 = vmul.f32 %v1202, %v1106
        %v1204 = vmul.f32 %v1202, %v1107
        %v1205 = vadd.f32 %v1165, %v1203
        %v1206 = vadd.f32 %v1166, %v1204
        %v1207 = vstv %s1201
        %v1208 = vmul.f32 %v1207, %v1114
        %v1209 = vmul.f32 %v1207, %v1115
        %v1210 = vadd.f32 %v1170, %v1208
        %v1211 = vadd.f32 %v1171, %v1209
        %1212 = vrot.lane.b32.xlu0 %v1106, 112
        %v1213 = vpop.permute.xlu0 %1212
        %1214 = vrot.lane.b32.xlu0 %v1107, 112
        %v1215 = vpop.permute.xlu0 %1214
        %v1216 = vsel %vm398, %v1213, %v1215
        %v1217 = vsel %vm398, %v1215, %v1213
        %1218 = vrot.lane.b32.xlu0 %v1114, 112
        %v1219 = vpop.permute.xlu0 %1218
        %1220 = vrot.lane.b32.xlu0 %v1115, 112
        %v1221 = vpop.permute.xlu0 %1220
        %v1222 = vsel %vm398, %v1219, %v1221
        %v1223 = vsel %vm398, %v1221, %v1219
        %v1224 = vmul.f32 %v1216, %v408
        %v1225 = vmul.f32 %v1217, %v409
        %v1226 = vmul.f32 %v1222, %v408
        %v1227 = vmul.f32 %v1223, %v409
        %s1228 = sld [smem:[#allocation2 + $0x20]]
        %s1229 = sld [smem:[#allocation2 + $0x51]]
        %v1230 = vstv %s1228
        %v1231 = vmul.f32 %v1230, %v1224
        %v1232 = vmul.f32 %v1230, %v1225
        %v1233 = vadd.f32 %v1193, %v1231
        %v1234 = vadd.f32 %v1194, %v1232
        %v1235 = vstv %s1229
        %v1236 = vmul.f32 %v1235, %v1226
        %v1237 = vmul.f32 %v1235, %v1227
        %v1238 = vadd.f32 %v1198, %v1236
        %v1239 = vadd.f32 %v1199, %v1237
        %1240 = vrot.lane.b32.xlu0 %v1106, 96
        %v1241 = vpop.permute.xlu0 %1240
        %1242 = vrot.lane.b32.xlu0 %v1107, 96
        %v1243 = vpop.permute.xlu0 %1242
        %v1244 = vsel %vm432, %v1241, %v1243
        %v1245 = vsel %vm432, %v1243, %v1241
        %1246 = vrot.lane.b32.xlu0 %v1114, 96
        %v1247 = vpop.permute.xlu0 %1246
        %1248 = vrot.lane.b32.xlu0 %v1115, 96
        %v1249 = vpop.permute.xlu0 %1248
        %v1250 = vsel %vm432, %v1247, %v1249
        %v1251 = vsel %vm432, %v1249, %v1247
        %v1252 = vmul.f32 %v1244, %v442
        %v1253 = vmul.f32 %v1245, %v443
        %v1254 = vmul.f32 %v1250, %v442
        %v1255 = vmul.f32 %v1251, %v443
        %s1256 = sld [smem:[#allocation2 + $0x27]]
        %s1257 = sld [smem:[#allocation2 + $0x58]]
        %v1258 = vstv %s1256
        %v1259 = vmul.f32 %v1258, %v1252
        %v1260 = vmul.f32 %v1258, %v1253
        %v1261 = vadd.f32 %v1205, %v1259
        %v1262 = vadd.f32 %v1206, %v1260
        %v1263 = vstv %s1257
        %v1264 = vmul.f32 %v1263, %v1254
        %v1265 = vmul.f32 %v1263, %v1255
        %v1266 = vadd.f32 %v1210, %v1264
        %v1267 = vadd.f32 %v1211, %v1265
        %1268 = vrot.lane.b32.xlu0 %v1106, 80
        %v1269 = vpop.permute.xlu0 %1268
        %1270 = vrot.lane.b32.xlu0 %v1107, 80
        %v1271 = vpop.permute.xlu0 %1270
        %v1272 = vsel %vm466, %v1269, %v1271
        %v1273 = vsel %vm466, %v1271, %v1269
        %1274 = vrot.lane.b32.xlu0 %v1114, 80
        %v1275 = vpop.permute.xlu0 %1274
        %1276 = vrot.lane.b32.xlu0 %v1115, 80
        %v1277 = vpop.permute.xlu0 %1276
        %v1278 = vsel %vm466, %v1275, %v1277
        %v1279 = vsel %vm466, %v1277, %v1275
        %v1280 = vmul.f32 %v1272, %v476
        %v1281 = vmul.f32 %v1273, %v477
        %v1282 = vmul.f32 %v1278, %v476
        %v1283 = vmul.f32 %v1279, %v477
        %s1284 = sld [smem:[#allocation2 + $0x2e]]
        %s1285 = sld [smem:[#allocation2 + $0x5f]]
        %v1286 = vstv %s1284
        %v1287 = vmul.f32 %v1286, %v1280
        %v1288 = vmul.f32 %v1286, %v1281
        %v1289 = vadd.f32 %v1233, %v1287
        %v1290 = vadd.f32 %v1234, %v1288
        %v1291 = vstv %s1285
        %v1292 = vmul.f32 %v1291, %v1282
        %v1293 = vmul.f32 %v1291, %v1283
        %v1294 = vadd.f32 %v1238, %v1292
        %v1295 = vadd.f32 %v1239, %v1293
        %s1296 = scalar_lea.vmem [#allocation6], 5
        %v1297 = vld [vmem:[%s1296] ss:$8 sm:$0x3]
        %1298 = vrot.lane.b32.xlu0 %v247, 126
        %v1299 = vpop.permute.xlu0 %1298
        %1300 = vrot.lane.b32.xlu0 %v248, 126
        %v1301 = vpop.permute.xlu0 %1300
        %vm1302 = vcmp.lt.s32.totalorder %v256, 126
        %v1303 = vsel %vm1302, %v1299, %v1301
        %v1304 = vsel %vm1302, %v1301, %v1299
        %v1306 = vperm.slane %v1297, 0
        %v1307 = vperm.slane %v1297, 1
        %v1310 = vmul.f32 %v1303, %v1306
        %v1311 = vmul.f32 %v1304, %v1307
        %1312 = vrot.lane.b32.xlu0 %v268, 126
        %v1313 = vpop.permute.xlu0 %1312
        %1314 = vrot.lane.b32.xlu0 %v269, 126
        %v1315 = vpop.permute.xlu0 %1314
        %v1316 = vsel %vm1302, %v1313, %v1315
        %v1317 = vsel %vm1302, %v1315, %v1313
        %v1318 = vmul.f32 %v1316, %v1306
        %v1319 = vmul.f32 %v1317, %v1307
        %1320 = vrot.lane.b32.xlu0 %v1310, 48
        %v1321 = vpop.permute.xlu0 %1320
        %1322 = vrot.lane.b32.xlu0 %v1311, 48
        %v1323 = vpop.permute.xlu0 %1322
        %v1324 = vsel %vm284, %v1321, %v1323
        %v1325 = vsel %vm284, %v1323, %v1321
        %1326 = vrot.lane.b32.xlu0 %v1318, 48
        %v1327 = vpop.permute.xlu0 %1326
        %1328 = vrot.lane.b32.xlu0 %v1319, 48
        %v1329 = vpop.permute.xlu0 %1328
        %v1330 = vsel %vm284, %v1327, %v1329
        %v1331 = vsel %vm284, %v1329, %v1327
        %v1332 = vmul.f32 %v1325, %v294
        %v1333 = vmul.f32 %v1324, %v295
        %v1334 = vmul.f32 %v1331, %v294
        %v1335 = vmul.f32 %v1330, %v295
        %s1336 = sld [smem:[#allocation2 + $0x5]]
        %s1337 = sld [smem:[#allocation2 + $0x36]]
        %v1338 = vstv %s1336
        %v1339 = vmul.f32 %v1338, %v1332
        %v1340 = vmul.f32 %v1338, %v1333
        %v1341 = vadd.f32 %v1261, %v1339
        %v1342 = vadd.f32 %v1262, %v1340
        %v1343 = vstv %s1337
        %v1344 = vmul.f32 %v1343, %v1334
        %v1345 = vmul.f32 %v1343, %v1335
        %v1346 = vadd.f32 %v1266, %v1344
        %v1347 = vadd.f32 %v1267, %v1345
        %1348 = vrot.lane.b32.xlu0 %v1310, 32
        %v1349 = vpop.permute.xlu0 %1348
        %1350 = vrot.lane.b32.xlu0 %v1311, 32
        %v1351 = vpop.permute.xlu0 %1350
        %v1352 = vsel %vm318, %v1349, %v1351
        %v1353 = vsel %vm318, %v1351, %v1349
        %1354 = vrot.lane.b32.xlu0 %v1318, 32
        %v1355 = vpop.permute.xlu0 %1354
        %1356 = vrot.lane.b32.xlu0 %v1319, 32
        %v1357 = vpop.permute.xlu0 %1356
        %v1358 = vsel %vm318, %v1355, %v1357
        %v1359 = vsel %vm318, %v1357, %v1355
        %v1360 = vmul.f32 %v1353, %v328
        %v1361 = vmul.f32 %v1352, %v329
        %v1362 = vmul.f32 %v1359, %v328
        %v1363 = vmul.f32 %v1358, %v329
        %s1364 = sld [smem:[#allocation2 + $0xc]]
        %s1365 = sld [smem:[#allocation2 + $0x3d]]
        %v1366 = vstv %s1364
        %v1367 = vmul.f32 %v1366, %v1360
        %v1368 = vmul.f32 %v1366, %v1361
        %v1369 = vadd.f32 %v1289, %v1367
        %v1370 = vadd.f32 %v1290, %v1368
        %v1371 = vstv %s1365
        %v1372 = vmul.f32 %v1371, %v1362
        %v1373 = vmul.f32 %v1371, %v1363
        %v1374 = vadd.f32 %v1294, %v1372
        %v1375 = vadd.f32 %v1295, %v1373
        %1376 = vrot.lane.b32.xlu0 %v1310, 16
        %v1377 = vpop.permute.xlu0 %1376
        %1378 = vrot.lane.b32.xlu0 %v1311, 16
        %v1379 = vpop.permute.xlu0 %1378
        %v1380 = vsel %vm352, %v1377, %v1379
        %v1381 = vsel %vm352, %v1379, %v1377
        %1382 = vrot.lane.b32.xlu0 %v1318, 16
        %v1383 = vpop.permute.xlu0 %1382
        %1384 = vrot.lane.b32.xlu0 %v1319, 16
        %v1385 = vpop.permute.xlu0 %1384
        %v1386 = vsel %vm352, %v1383, %v1385
        %v1387 = vsel %vm352, %v1385, %v1383
        %v1388 = vmul.f32 %v1381, %v362
        %v1389 = vmul.f32 %v1380, %v363
        %v1390 = vmul.f32 %v1387, %v362
        %v1391 = vmul.f32 %v1386, %v363
        %s1392 = sld [smem:[#allocation2 + $0x13]]
        %s1393 = sld [smem:[#allocation2 + $0x44]]
        %v1394 = vstv %s1392
        %v1395 = vmul.f32 %v1394, %v1388
        %v1396 = vmul.f32 %v1394, %v1389
        %v1397 = vadd.f32 %v1341, %v1395
        %v1398 = vadd.f32 %v1342, %v1396
        %v1399 = vstv %s1393
        %v1400 = vmul.f32 %v1399, %v1390
        %v1401 = vmul.f32 %v1399, %v1391
        %v1402 = vadd.f32 %v1346, %v1400
        %v1403 = vadd.f32 %v1347, %v1401
        %s1404 = sld [smem:[#allocation2 + $0x1a]]
        %s1405 = sld [smem:[#allocation2 + $0x4b]]
        %v1406 = vstv %s1404
        %v1407 = vmul.f32 %v1406, %v1310
        %v1408 = vmul.f32 %v1406, %v1311
        %v1409 = vadd.f32 %v1369, %v1407
        %v1410 = vadd.f32 %v1370, %v1408
        %v1411 = vstv %s1405
        %v1412 = vmul.f32 %v1411, %v1318
        %v1413 = vmul.f32 %v1411, %v1319
        %v1414 = vadd.f32 %v1374, %v1412
        %v1415 = vadd.f32 %v1375, %v1413
        %1416 = vrot.lane.b32.xlu0 %v1310, 112
        %v1417 = vpop.permute.xlu0 %1416
        %1418 = vrot.lane.b32.xlu0 %v1311, 112
        %v1419 = vpop.permute.xlu0 %1418
        %v1420 = vsel %vm398, %v1417, %v1419
        %v1421 = vsel %vm398, %v1419, %v1417
        %1422 = vrot.lane.b32.xlu0 %v1318, 112
        %v1423 = vpop.permute.xlu0 %1422
        %1424 = vrot.lane.b32.xlu0 %v1319, 112
        %v1425 = vpop.permute.xlu0 %1424
        %v1426 = vsel %vm398, %v1423, %v1425
        %v1427 = vsel %vm398, %v1425, %v1423
        %v1428 = vmul.f32 %v1420, %v408
        %v1429 = vmul.f32 %v1421, %v409
        %v1430 = vmul.f32 %v1426, %v408
        %v1431 = vmul.f32 %v1427, %v409
        %s1432 = sld [smem:[#allocation2 + $0x21]]
        %s1433 = sld [smem:[#allocation2 + $0x52]]
        %v1434 = vstv %s1432
        %v1435 = vmul.f32 %v1434, %v1428
        %v1436 = vmul.f32 %v1434, %v1429
        %v1437 = vadd.f32 %v1397, %v1435
        %v1438 = vadd.f32 %v1398, %v1436
        %v1439 = vstv %s1433
        %v1440 = vmul.f32 %v1439, %v1430
        %v1441 = vmul.f32 %v1439, %v1431
        %v1442 = vadd.f32 %v1402, %v1440
        %v1443 = vadd.f32 %v1403, %v1441
        %1444 = vrot.lane.b32.xlu0 %v1310, 96
        %v1445 = vpop.permute.xlu0 %1444
        %1446 = vrot.lane.b32.xlu0 %v1311, 96
        %v1447 = vpop.permute.xlu0 %1446
        %v1448 = vsel %vm432, %v1445, %v1447
        %v1449 = vsel %vm432, %v1447, %v1445
        %1450 = vrot.lane.b32.xlu0 %v1318, 96
        %v1451 = vpop.permute.xlu0 %1450
        %1452 = vrot.lane.b32.xlu0 %v1319, 96
        %v1453 = vpop.permute.xlu0 %1452
        %v1454 = vsel %vm432, %v1451, %v1453
        %v1455 = vsel %vm432, %v1453, %v1451
        %v1456 = vmul.f32 %v1448, %v442
        %v1457 = vmul.f32 %v1449, %v443
        %v1458 = vmul.f32 %v1454, %v442
        %v1459 = vmul.f32 %v1455, %v443
        %s1460 = sld [smem:[#allocation2 + $0x28]]
        %s1461 = sld [smem:[#allocation2 + $0x59]]
        %v1462 = vstv %s1460
        %v1463 = vmul.f32 %v1462, %v1456
        %v1464 = vmul.f32 %v1462, %v1457
        %v1465 = vadd.f32 %v1409, %v1463
        %v1466 = vadd.f32 %v1410, %v1464
        %v1467 = vstv %s1461
        %v1468 = vmul.f32 %v1467, %v1458
        %v1469 = vmul.f32 %v1467, %v1459
        %v1470 = vadd.f32 %v1414, %v1468
        %v1471 = vadd.f32 %v1415, %v1469
        %1472 = vrot.lane.b32.xlu0 %v1310, 80
        %v1473 = vpop.permute.xlu0 %1472
        %1474 = vrot.lane.b32.xlu0 %v1311, 80
        %v1475 = vpop.permute.xlu0 %1474
        %v1476 = vsel %vm466, %v1473, %v1475
        %v1477 = vsel %vm466, %v1475, %v1473
        %1478 = vrot.lane.b32.xlu0 %v1318, 80
        %v1479 = vpop.permute.xlu0 %1478
        %1480 = vrot.lane.b32.xlu0 %v1319, 80
        %v1481 = vpop.permute.xlu0 %1480
        %v1482 = vsel %vm466, %v1479, %v1481
        %v1483 = vsel %vm466, %v1481, %v1479
        %v1484 = vmul.f32 %v1476, %v476
        %v1485 = vmul.f32 %v1477, %v477
        %v1486 = vmul.f32 %v1482, %v476
        %v1487 = vmul.f32 %v1483, %v477
        %s1488 = sld [smem:[#allocation2 + $0x2f]]
        %s1489 = sld [smem:[#allocation2 + $0x60]]
        %v1490 = vstv %s1488
        %v1491 = vmul.f32 %v1490, %v1484
        %v1492 = vmul.f32 %v1490, %v1485
        %v1493 = vadd.f32 %v1437, %v1491
        %v1494 = vadd.f32 %v1438, %v1492
        %v1495 = vstv %s1489
        %v1496 = vmul.f32 %v1495, %v1486
        %v1497 = vmul.f32 %v1495, %v1487
        %v1498 = vadd.f32 %v1442, %v1496
        %v1499 = vadd.f32 %v1443, %v1497
        %s1500 = scalar_lea.vmem [#allocation6], 6
        %v1501 = vld [vmem:[%s1500] ss:$8 sm:$0x3]
        %1502 = vrot.lane.b32.xlu0 %v247, 125
        %v1503 = vpop.permute.xlu0 %1502
        %1504 = vrot.lane.b32.xlu0 %v248, 125
        %v1505 = vpop.permute.xlu0 %1504
        %vm1506 = vcmp.lt.s32.totalorder %v256, 125
        %v1507 = vsel %vm1506, %v1503, %v1505
        %v1508 = vsel %vm1506, %v1505, %v1503
        %v1510 = vperm.slane %v1501, 0
        %v1511 = vperm.slane %v1501, 1
        %v1514 = vmul.f32 %v1507, %v1510
        %v1515 = vmul.f32 %v1508, %v1511
        %1516 = vrot.lane.b32.xlu0 %v268, 125
        %v1517 = vpop.permute.xlu0 %1516
        %1518 = vrot.lane.b32.xlu0 %v269, 125
        %v1519 = vpop.permute.xlu0 %1518
        %v1520 = vsel %vm1506, %v1517, %v1519
        %v1521 = vsel %vm1506, %v1519, %v1517
        %v1522 = vmul.f32 %v1520, %v1510
        %v1523 = vmul.f32 %v1521, %v1511
        %1524 = vrot.lane.b32.xlu0 %v1514, 48
        %v1525 = vpop.permute.xlu0 %1524
        %1526 = vrot.lane.b32.xlu0 %v1515, 48
        %v1527 = vpop.permute.xlu0 %1526
        %v1528 = vsel %vm284, %v1525, %v1527
        %v1529 = vsel %vm284, %v1527, %v1525
        %1530 = vrot.lane.b32.xlu0 %v1522, 48
        %v1531 = vpop.permute.xlu0 %1530
        %1532 = vrot.lane.b32.xlu0 %v1523, 48
        %v1533 = vpop.permute.xlu0 %1532
        %v1534 = vsel %vm284, %v1531, %v1533
        %v1535 = vsel %vm284, %v1533, %v1531
        %v1536 = vmul.f32 %v1529, %v294
        %v1537 = vmul.f32 %v1528, %v295
        %v1538 = vmul.f32 %v1535, %v294
        %v1539 = vmul.f32 %v1534, %v295
        %s1540 = sld [smem:[#allocation2 + $0x6]]
        %s1541 = sld [smem:[#allocation2 + $0x37]]
        %v1542 = vstv %s1540
        %v1543 = vmul.f32 %v1542, %v1536
        %v1544 = vmul.f32 %v1542, %v1537
        %v1545 = vadd.f32 %v1465, %v1543
        %v1546 = vadd.f32 %v1466, %v1544
        %v1547 = vstv %s1541
        %v1548 = vmul.f32 %v1547, %v1538
        %v1549 = vmul.f32 %v1547, %v1539
        %v1550 = vadd.f32 %v1470, %v1548
        %v1551 = vadd.f32 %v1471, %v1549
        %1552 = vrot.lane.b32.xlu0 %v1514, 32
        %v1553 = vpop.permute.xlu0 %1552
        %1554 = vrot.lane.b32.xlu0 %v1515, 32
        %v1555 = vpop.permute.xlu0 %1554
        %v1556 = vsel %vm318, %v1553, %v1555
        %v1557 = vsel %vm318, %v1555, %v1553
        %1558 = vrot.lane.b32.xlu0 %v1522, 32
        %v1559 = vpop.permute.xlu0 %1558
        %1560 = vrot.lane.b32.xlu0 %v1523, 32
        %v1561 = vpop.permute.xlu0 %1560
        %v1562 = vsel %vm318, %v1559, %v1561
        %v1563 = vsel %vm318, %v1561, %v1559
        %v1564 = vmul.f32 %v1557, %v328
        %v1565 = vmul.f32 %v1556, %v329
        %v1566 = vmul.f32 %v1563, %v328
        %v1567 = vmul.f32 %v1562, %v329
        %s1568 = sld [smem:[#allocation2 + $0xd]]
        %s1569 = sld [smem:[#allocation2 + $0x3e]]
        %v1570 = vstv %s1568
        %v1571 = vmul.f32 %v1570, %v1564
        %v1572 = vmul.f32 %v1570, %v1565
        %v1573 = vadd.f32 %v1493, %v1571
        %v1574 = vadd.f32 %v1494, %v1572
        %v1575 = vstv %s1569
        %v1576 = vmul.f32 %v1575, %v1566
        %v1577 = vmul.f32 %v1575, %v1567
        %v1578 = vadd.f32 %v1498, %v1576
        %v1579 = vadd.f32 %v1499, %v1577
        %1580 = vrot.lane.b32.xlu0 %v1514, 16
        %v1581 = vpop.permute.xlu0 %1580
        %1582 = vrot.lane.b32.xlu0 %v1515, 16
        %v1583 = vpop.permute.xlu0 %1582
        %v1584 = vsel %vm352, %v1581, %v1583
        %v1585 = vsel %vm352, %v1583, %v1581
        %1586 = vrot.lane.b32.xlu0 %v1522, 16
        %v1587 = vpop.permute.xlu0 %1586
        %1588 = vrot.lane.b32.xlu0 %v1523, 16
        %v1589 = vpop.permute.xlu0 %1588
        %v1590 = vsel %vm352, %v1587, %v1589
        %v1591 = vsel %vm352, %v1589, %v1587
        %v1592 = vmul.f32 %v1585, %v362
        %v1593 = vmul.f32 %v1584, %v363
        %v1594 = vmul.f32 %v1591, %v362
        %v1595 = vmul.f32 %v1590, %v363
        %s1596 = sld [smem:[#allocation2 + $0x14]]
        %s1597 = sld [smem:[#allocation2 + $0x45]]
        %v1598 = vstv %s1596
        %v1599 = vmul.f32 %v1598, %v1592
        %v1600 = vmul.f32 %v1598, %v1593
        %v1601 = vadd.f32 %v1545, %v1599
        %v1602 = vadd.f32 %v1546, %v1600
        %v1603 = vstv %s1597
        %v1604 = vmul.f32 %v1603, %v1594
        %v1605 = vmul.f32 %v1603, %v1595
        %v1606 = vadd.f32 %v1550, %v1604
        %v1607 = vadd.f32 %v1551, %v1605
        %s1608 = sld [smem:[#allocation2 + $0x1b]]
        %s1609 = sld [smem:[#allocation2 + $0x4c]]
        %v1610 = vstv %s1608
        %v1611 = vmul.f32 %v1610, %v1514
        %v1612 = vmul.f32 %v1610, %v1515
        %v1613 = vadd.f32 %v1573, %v1611
        %v1614 = vadd.f32 %v1574, %v1612
        %v1615 = vstv %s1609
        %v1616 = vmul.f32 %v1615, %v1522
        %v1617 = vmul.f32 %v1615, %v1523
        %v1618 = vadd.f32 %v1578, %v1616
        %v1619 = vadd.f32 %v1579, %v1617
        %1620 = vrot.lane.b32.xlu0 %v1514, 112
        %v1621 = vpop.permute.xlu0 %1620
        %1622 = vrot.lane.b32.xlu0 %v1515, 112
        %v1623 = vpop.permute.xlu0 %1622
        %v1624 = vsel %vm398, %v1621, %v1623
        %v1625 = vsel %vm398, %v1623, %v1621
        %1626 = vrot.lane.b32.xlu0 %v1522, 112
        %v1627 = vpop.permute.xlu0 %1626
        %1628 = vrot.lane.b32.xlu0 %v1523, 112
        %v1629 = vpop.permute.xlu0 %1628
        %v1630 = vsel %vm398, %v1627, %v1629
        %v1631 = vsel %vm398, %v1629, %v1627
        %v1632 = vmul.f32 %v1624, %v408
        %v1633 = vmul.f32 %v1625, %v409
        %v1634 = vmul.f32 %v1630, %v408
        %v1635 = vmul.f32 %v1631, %v409
        %s1636 = sld [smem:[#allocation2 + $0x22]]
        %s1637 = sld [smem:[#allocation2 + $0x53]]
        %v1638 = vstv %s1636
        %v1639 = vmul.f32 %v1638, %v1632
        %v1640 = vmul.f32 %v1638, %v1633
        %v1641 = vadd.f32 %v1601, %v1639
        %v1642 = vadd.f32 %v1602, %v1640
        %v1643 = vstv %s1637
        %v1644 = vmul.f32 %v1643, %v1634
        %v1645 = vmul.f32 %v1643, %v1635
        %v1646 = vadd.f32 %v1606, %v1644
        %v1647 = vadd.f32 %v1607, %v1645
        %1648 = vrot.lane.b32.xlu0 %v1514, 96
        %v1649 = vpop.permute.xlu0 %1648
        %1650 = vrot.lane.b32.xlu0 %v1515, 96
        %v1651 = vpop.permute.xlu0 %1650
        %v1652 = vsel %vm432, %v1649, %v1651
        %v1653 = vsel %vm432, %v1651, %v1649
        %1654 = vrot.lane.b32.xlu0 %v1522, 96
        %v1655 = vpop.permute.xlu0 %1654
        %1656 = vrot.lane.b32.xlu0 %v1523, 96
        %v1657 = vpop.permute.xlu0 %1656
        %v1658 = vsel %vm432, %v1655, %v1657
        %v1659 = vsel %vm432, %v1657, %v1655
        %v1660 = vmul.f32 %v1652, %v442
        %v1661 = vmul.f32 %v1653, %v443
        %v1662 = vmul.f32 %v1658, %v442
        %v1663 = vmul.f32 %v1659, %v443
        %s1664 = sld [smem:[#allocation2 + $0x29]]
        %s1665 = sld [smem:[#allocation2 + $0x5a]]
        %v1666 = vstv %s1664
        %v1667 = vmul.f32 %v1666, %v1660
        %v1668 = vmul.f32 %v1666, %v1661
        %v1669 = vadd.f32 %v1613, %v1667
        %v1670 = vadd.f32 %v1614, %v1668
        %v1671 = vstv %s1665
        %v1672 = vmul.f32 %v1671, %v1662
        %v1673 = vmul.f32 %v1671, %v1663
        %v1674 = vadd.f32 %v1618, %v1672
        %v1675 = vadd.f32 %v1619, %v1673
        %1676 = vrot.lane.b32.xlu0 %v1514, 80
        %v1677 = vpop.permute.xlu0 %1676
        %1678 = vrot.lane.b32.xlu0 %v1515, 80
        %v1679 = vpop.permute.xlu0 %1678
        %v1680 = vsel %vm466, %v1677, %v1679
        %v1681 = vsel %vm466, %v1679, %v1677
        %1682 = vrot.lane.b32.xlu0 %v1522, 80
        %v1683 = vpop.permute.xlu0 %1682
        %1684 = vrot.lane.b32.xlu0 %v1523, 80
        %v1685 = vpop.permute.xlu0 %1684
        %v1686 = vsel %vm466, %v1683, %v1685
        %v1687 = vsel %vm466, %v1685, %v1683
        %v1688 = vmul.f32 %v1680, %v476
        %v1689 = vmul.f32 %v1681, %v477
        %v1690 = vmul.f32 %v1686, %v476
        %v1691 = vmul.f32 %v1687, %v477
        %s1692 = sld [smem:[#allocation2 + $0x30]]
        %s1693 = sld [smem:[#allocation2 + $0x61]]
        %v1694 = vstv %s1692
        %v1695 = vmul.f32 %v1694, %v1688
        %v1696 = vmul.f32 %v1694, %v1689
        %v1697 = vadd.f32 %v1641, %v1695
        %v1698 = vadd.f32 %v1642, %v1696
        %v1699 = vstv %s1693
        %v1700 = vmul.f32 %v1699, %v1690
        %v1701 = vmul.f32 %v1699, %v1691
        %v1702 = vadd.f32 %v1646, %v1700
        %v1703 = vadd.f32 %v1647, %v1701
        %v1704 = vadd.f32 %v1697, %v1702
        %v1705 = vadd.f32 %v1698, %v1703
        %v1706 = vadd.f32 %v1669, %v1674
        %v1707 = vadd.f32 %v1670, %v1675
        %v1708 = vadd.f32 %v1704, %v1706
        %v1709 = vadd.f32 %v1705, %v1707
        %v1710 = vxor.u32 %v1708, 2147483648
        %v1711 = vxor.u32 %v1709, 2147483648
        %v1712 = vmul.f32 %v1710, 1.442695
        %v1713 = vpow.pop %v1712
        %v1714 = vmul.f32 %v1711, 1.442695
        %v1715 = vpow.pop %v1714
        %v1716 = vadd.f32 %v1713, 1.0
        %v1717 = vadd.f32 %v1715, 1.0
        %v1718 = vrcp.pop %v1716
        %v1719 = vmul.f32 %v1716, %v1718
        %v1720 = vsub.f32 1.0, %v1719
        %v1721 = vmul.f32 %v1718, %v1720
        %v1722 = vadd.f32 %v1718, %v1721
        %vm1723 = vweird.f32 %v1716
        %vm1724 = vweird.f32 %v1718
        %vm1725 = vmor %vm1723, %vm1724
        %v1726 = vsel %vm1725, %v1718, %v1722
        %v1727 = vand.u32 2147483647, %v1716
        %vm1728 = vcmp.eq.f32.partialorder %v1727, 8.507059e+37
        %v1729 = vand.u32 %v1716, 2147483648
        %v1730 = vor.u32 1.1754944e-38, %v1729
        %v1731 = vsel %vm1728, %v1730, %v1726
        %v1732 = vmul.f32 1.0, %v1731
        %v1733 = vrcp.pop %v1717
        %v1734 = vmul.f32 %v1717, %v1733
        %v1735 = vsub.f32 1.0, %v1734
        %v1736 = vmul.f32 %v1733, %v1735
        %v1737 = vadd.f32 %v1733, %v1736
        %vm1738 = vweird.f32 %v1717
        %vm1739 = vweird.f32 %v1733
        %vm1740 = vmor %vm1738, %vm1739
        %v1741 = vsel %vm1740, %v1733, %v1737
        %v1742 = vand.u32 2147483647, %v1717
        %vm1743 = vcmp.eq.f32.partialorder %v1742, 8.507059e+37
        %v1744 = vand.u32 %v1717, 2147483648
        %v1745 = vor.u32 1.1754944e-38, %v1744
        %v1746 = vsel %vm1743, %v1745, %v1741
        %v1747 = vmul.f32 1.0, %v1746
        %v1750 = vrot.slane %v1747, 7
        %vm1751 = vcmask 1040384
        %v1752 = vsel %vm1751, %v1732, %v1750
        %v1754 = vlaneseq
        %vm1755 = vcmp.ge.s32.totalorder %v1754, 0
        %vm1756 = vcmp.lt.s32.totalorder %v1754, 256
        %vm1757 = vmand %vm1755, %vm1756
        %1758 = vst.msk [vmem:[%s219] sm:$0x3] %vm1757, %v1752
        %s1759 = sand.u32 %s98, 1
        %s1760 = scalar_lea.sflag [#allocation4], %s1759
        %s1761 = sand.u32 %s98, 1
        %s1762 = smul.addr %s1761, 2
        %s1763 = scalar_lea.vmem [#allocation9], %s1762
        // Predicated region
        $region45: #{tpu_custom_call.1} parent=31 // pred_check
          %p1764 = pneg %p108
        $region46: #{tpu_custom_call.1} parent=31 // pred_check_branch
          %1766 = sbr.rel (%p1764) target = $region48
        $region47: #{tpu_custom_call.1} parent=31 // pred_region
          %1768 = vsyncadd %s1760, 0
          %s1769 = smul.addr %s22, 2
          %s1770 = scalar_lea.hbm %s3, %s1769
          %s1772 = sshll.u32 %s1763, 4
          %s1773 = int_to_ptr.vmem [resolvable:$true] %s1772
          %s1774 = sshll.u32 %s1770, 4
          %s1775 = int_to_ptr.hbm [resolvable:$true] %s1774
          %1777 = dma.vmem_to_hbm [thread:$0]  %s1773, 32, %s1775, %s1760
        $region48: #{tpu_custom_call.1} parent=31 // pred_fallthru
          _
      $region32: #{tpu_custom_call.1} parent=5 // pred_fallthru
        _
      %p1778 = scmp.le.s32.totalorder 2, %s17
      // Predicated region
      $region49: #{tpu_custom_call.1} parent=5 // pred_check
        %p1779 = pneg %p1778
      $region50: #{tpu_custom_call.1} parent=5 // pred_check_branch
        %1781 = sbr.rel (%p1779) target = $region52
      $region51: #{tpu_custom_call.1} parent=5 // pred_region
        %s1782 = ssub.s32 %s17, 2
        // Predicated region
        $region53: #{tpu_custom_call.1} parent=51 // pred_check
          %p1783 = pneg %p114
        $region54: #{tpu_custom_call.1} parent=51 // pred_check_branch
          %1785 = sbr.rel (%p1783) target = $region56
        $region55: #{tpu_custom_call.1} parent=51 // pred_region
          %s1786 = sand.u32 %s99, 1
          %s1787 = scalar_lea.sflag [#allocation4], %s1786
          %s1788 = sand.u32 %s99, 1
          %s1789 = smul.addr %s1788, 2
          %s1790 = scalar_lea.vmem [#allocation9], %s1789
          %1792 = dma.done %s1787, 32
        $region56: #{tpu_custom_call.1} parent=51 // pred_fallthru
          _
      $region52: #{tpu_custom_call.1} parent=5 // pred_fallthru
        _
    $region6: #{tpu_custom_call.1} parent=1 // loop_footer
      %s21 = sadd.s32 1, %s17
    $region7: #{tpu_custom_call.1} parent=1 // loop_footer_branch
      %16 = sbr.rel target = $region3
    $region8: #{tpu_custom_call.1} parent=1 // loop_exit
      _
    %1793 = vsyncpa [#allocation3], 1
    %s1794 = scalar_lea.sflag [#allocation3], 1
    %1795 = vsyncpa %s1794, 1
    %1796 = vsyncpa [#allocation8], 1
    %s1797 = scalar_lea.sflag [#allocation8], 1
    %1798 = vsyncpa %s1797, 1
    %1799 = vsyncpa [#allocation4], 1
    %s1800 = scalar_lea.sflag [#allocation4], 1
    %1801 = vsyncpa %s1800, 1
    %1802 = vsyncpa [#allocation5], 1
    %s1803 = scalar_lea.sflag [#allocation5], 1
    %1804 = vsyncpa %s1803, 1

</llo_original>
